<compile_context>
chip_gen: v7x
topology: tpu7x:2x2x1
jax: 0.10.0
libtpu: 0.0.40
codegen_flags: <defaults>
</compile_context>

<pallas_src>
import jax
import jax.numpy as jnp
from jax.experimental import pallas as pl
from jax.experimental.pallas import tpu as pltpu

K = 4  # Conv1d kernel_size ('same' padding => pad 1 left / 2 right in torch)


def cnn_forward_pallas(x, params, b_tile=8):
    """x: (B, 1, L) float32 (PyTorch NCW).  Returns (B, 1) float32.

    b_tile: batch elements packed per grid step (8 fills v5e MXU rows with
    L=16; use 16+ on v6e/v7x for even better MXU fill at large batch).
    """
    B, _, L = x.shape
    BT = b_tile
    Bp = ((B + BT - 1) // BT) * BT          # pad batch to a multiple of BT
    nt = Bp // BT
    rows = L * BT                            # rows per tile, t-major ordering

    f32, bf16 = jnp.float32, jnp.bfloat16

    # ---------------- glue: input im2col + t-major packing ----------------
    x2 = x[:, 0, :].astype(f32)
    if Bp != B:
        x2 = jnp.pad(x2, ((0, Bp - B), (0, 0)))
    xp = jnp.pad(x2, ((0, 0), (1, 2)))                          # (Bp, L+3)
    xs = jnp.stack([xp[:, k:k + L] for k in range(K)], axis=-1)  # (Bp, L, 4)
    # row = t*BT + b_local  (time-major inside each batch tile)
    xs_t = (xs.reshape(nt, BT, L, K)
              .transpose(0, 2, 1, 3)
              .reshape(nt, rows, K)
              .astype(bf16))

    # ---------------- glue: weights into kernel layout (bf16) -------------
    # conv1 (Cin=1): (4, 128);  convN: tap-major concat -> (4*Cin, Cout)
    w1 = jnp.transpose(params['conv1_w'], (2, 1, 0))[:, 0, :].astype(bf16)
    w2 = jnp.transpose(params['conv2_w'], (2, 1, 0)).reshape(K * 128, 128).astype(bf16)
    w3 = jnp.transpose(params['conv3_w'], (2, 1, 0)).reshape(K * 128, 64).astype(bf16)
    w4 = jnp.transpose(params['conv4_w'], (2, 1, 0)).reshape(K * 64, 32).astype(bf16)
    b1 = params['conv1_b'][None, :].astype(f32)
    b2 = params['conv2_b'][None, :].astype(f32)
    b3 = params['conv3_b'][None, :].astype(f32)
    b4 = params['conv4_b'][None, :].astype(f32)
    # fc1.weight[o, c*L + t]  ->  wfc1[t, c, o]   (torch channel-major flatten)
    wfc1 = jnp.transpose(params['fc1_w'].reshape(64, 32, L), (2, 1, 0)).astype(bf16)
    bfc1 = params['fc1_b'][None, :].astype(f32)                  # (1, 64)
    wfc2 = params['fc2_w'].astype(f32)                           # (1, 64)
    bfc2 = params['fc2_b'][None, :].astype(f32)                  # (1, 1)

    # ---------------- kernel ----------------
    def _kernel(xs_ref, w1_ref, b1_ref, w2_ref, b2_ref, w3_ref, b3_ref,
                w4_ref, b4_ref, wfc1_ref, bfc1_ref, wfc2_ref, bfc2_ref,
                o_ref):

        def conv_relu(h, w_ref, b_ref, c_in):
            # h: (rows, c_in) f32, t-major rows.  Taps x[t-1],x[t],x[t+1],x[t+2]
            # ('same' pad 1 left / 2 right).  A time shift == shift by BT rows
            # (one sublane tile), so taps never cross batch-element boundaries.
            z1 = jnp.zeros((BT, c_in), f32)
            z2 = jnp.zeros((2 * BT, c_in), f32)
            taps = (jnp.concatenate([z1, h[:rows - BT, :]], axis=0),   # x[t-1]
                    h,                                                 # x[t]
                    jnp.concatenate([h[BT:, :], z1], axis=0),          # x[t+1]
                    jnp.concatenate([h[2 * BT:, :], z2], axis=0))      # x[t+2]
            if c_in % 128 == 0:
                # fuse the 4 taps into one (rows, 4*c_in) @ (4*c_in, c_out)
                hcat = jnp.concatenate(taps, axis=-1).astype(bf16)
                y = jnp.dot(hcat, w_ref[...], preferred_element_type=f32)
            else:
                # lane-misaligned concat avoided: 4 independent dots + add
                w_all = w_ref[...]
                y = sum(jnp.dot(t.astype(bf16),
                                w_all[k * c_in:(k + 1) * c_in, :],
                                preferred_element_type=f32)
                        for k, t in enumerate(taps))
            return jnp.maximum(y + b_ref[...], 0.0)

        # conv1 (Cin=1): the 4 taps were im2col'd in glue -> one matmul.
        h = jnp.dot(xs_ref[0], w1_ref[...], preferred_element_type=f32)
        h = jnp.maximum(h + b1_ref[...], 0.0)          # (rows, 128)

        h = conv_relu(h, w2_ref, b2_ref, 128)          # (rows, 128)
        h = conv_relu(h, w3_ref, b3_ref, 128)          # (rows, 64)
        h = conv_relu(h, w4_ref, b4_ref, 64)           # (rows, 32)

        # fc1: one batched matmul over the L time groups + reduce over L
        # (replaces the previous chain of L serial 1-row matmuls).
        h3d = h.reshape(L, BT, 32).astype(bf16)        # free reshape (split sublanes)
        part = jax.lax.dot_general(
            h3d, wfc1_ref[...],
            dimension_numbers=(((2,), (1,)), ((0,), (0,))),
            preferred_element_type=f32)                # (L, BT, 64)
        h5 = jnp.maximum(jnp.sum(part, axis=0) + bfc1_ref[...], 0.0)   # (BT, 64)

        # fc2: VPU multiply + lane reduction (no 1-column MXU matmul).
        out = jnp.sum(h5 * wfc2_ref[...], axis=-1, keepdims=True) + bfc2_ref[...]
        o_ref[...] = out                               # (BT, 1) f32

    def full_spec(a):
        nd = a.ndim
        return pl.BlockSpec(a.shape, lambda i, _nd=nd: (0,) * _nd)

    out = pl.pallas_call(
        _kernel,
        out_shape=jax.ShapeDtypeStruct((Bp, 1), jnp.float32),
        grid_spec=pltpu.PrefetchScalarGridSpec(
            num_scalar_prefetch=0,
            grid=(nt,),
            in_specs=[
                pl.BlockSpec((1, rows, K), lambda i: (i, 0, 0)),
                full_spec(w1), full_spec(b1), full_spec(w2), full_spec(b2),
                full_spec(w3), full_spec(b3), full_spec(w4), full_spec(b4),
                full_spec(wfc1), full_spec(bfc1), full_spec(wfc2), full_spec(bfc2),
            ],
            out_specs=pl.BlockSpec((BT, 1), lambda i: (i, 0)),
        ),
        compiler_params=pltpu.CompilerParams(
            dimension_semantics=("parallel",)),   # batch tiles are independent
    )(xs_t, w1, b1, w2, b2, w3, b3, w4, b4, wfc1, bfc1, wfc2, bfc2)

    return out[:B]


def cnn_forward_reference(x, params):
    """Pure-JAX f32 reference matching torch semantics (NCW, 'same' pad = (1,2))."""
    def conv(h, w, b):
        o = jax.lax.conv_general_dilated(
            h, w, window_strides=(1,), padding=[(1, 2)],
            dimension_numbers=('NCH', 'OIH', 'NCH'))
        return jax.nn.relu(o + b[None, :, None])

    h = conv(x, params['conv1_w'], params['conv1_b'])
    h = conv(h, params['conv2_w'], params['conv2_b'])
    h = conv(h, params['conv3_w'], params['conv3_b'])
    h = conv(h, params['conv4_w'], params['conv4_b'])
    flat = h.reshape(h.shape[0], -1)                  # channel-major, like torch .view
    h = jax.nn.relu(flat @ params['fc1_w'].T + params['fc1_b'])
    return h @ params['fc2_w'].T + params['fc2_b']


def make_params(key, window_size):
    ks = jax.random.split(key, 12)

    def init(k, shape, scale=0.1):
        return jax.random.normal(k, shape, dtype=jnp.float32) * scale

    L = window_size
    return {
        'conv1_w': init(ks[0], (128, 1, 4)),   'conv1_b': init(ks[1], (128,)),
        'conv2_w': init(ks[2], (128, 128, 4)), 'conv2_b': init(ks[3], (128,)),
        'conv3_w': init(ks[4], (64, 128, 4)),  'conv3_b': init(ks[5], (64,)),
        'conv4_w': init(ks[6], (32, 64, 4)),   'conv4_b': init(ks[7], (32,)),
        'fc1_w':   init(ks[8], (64, 32 * L)),  'fc1_b':   init(ks[9], (64,)),
        'fc2_w':   init(ks[10], (1, 64)),      'fc2_b':   init(ks[11], (1,)),
    }


if __name__ == "__main__":
    window_size = 16
    batch = 2

    root = jax.random.PRNGKey(0)
    pkey, xkey = jax.random.split(root)
    params = make_params(pkey, window_size)
    x = jax.random.normal(xkey, (batch, 1, window_size), dtype=jnp.float32)

    y = jax.block_until_ready(cnn_forward_pallas(x, params))        # (B, 1)
    y_ref = jax.block_until_ready(cnn_forward_reference(x, params))

    assert y.shape == (batch, 1)
    # bf16 weights/activations with f32 accumulation -> modest tolerance
    assert jnp.allclose(y, y_ref, rtol=5e-2, atol=1e-2), "mismatch vs reference"
    print("KERNEL_OK")
</pallas_src>

<mosaic_0001>
module attributes {stable_mosaic.version = 11 : i64} {
  func.func @_kernel(%arg0: i32, %arg1: memref<1x128x4xbf16, #tpu.memory_space<vmem>>, %arg2: memref<4x128xbf16, #tpu.memory_space<vmem>>, %arg3: memref<1x128xf32, #tpu.memory_space<vmem>>, %arg4: memref<512x128xbf16, #tpu.memory_space<vmem>>, %arg5: memref<1x128xf32, #tpu.memory_space<vmem>>, %arg6: memref<512x64xbf16, #tpu.memory_space<vmem>>, %arg7: memref<1x64xf32, #tpu.memory_space<vmem>>, %arg8: memref<256x32xbf16, #tpu.memory_space<vmem>>, %arg9: memref<1x32xf32, #tpu.memory_space<vmem>>, %arg10: memref<16x32x64xbf16, #tpu.memory_space<vmem>>, %arg11: memref<1x64xf32, #tpu.memory_space<vmem>>, %arg12: memref<1x64xf32, #tpu.memory_space<vmem>>, %arg13: memref<1x1xf32, #tpu.memory_space<vmem>>, %arg14: memref<8x1xf32, #tpu.memory_space<vmem>>) attributes {dimension_semantics = [#tpu.dimension_semantics<parallel>], iteration_bounds = array<i64: 1>, scalar_prefetch = 0 : i64, scratch_operands = 0 : i64, tpu.core_type = #tpu.core_type<tc>, window_params = [{transform_indices = @transform_0, window_bounds = array<i64: 1, 128, 4>}, {pipeline_mode = #tpu.pipeline_mode<synchronous>, transform_indices = @transform_1, window_bounds = array<i64: 4, 128>}, {pipeline_mode = #tpu.pipeline_mode<synchronous>, transform_indices = @transform_2, window_bounds = array<i64: 1, 128>}, {pipeline_mode = #tpu.pipeline_mode<synchronous>, transform_indices = @transform_3, window_bounds = array<i64: 512, 128>}, {pipeline_mode = #tpu.pipeline_mode<synchronous>, transform_indices = @transform_4, window_bounds = array<i64: 1, 128>}, {pipeline_mode = #tpu.pipeline_mode<synchronous>, transform_indices = @transform_5, window_bounds = array<i64: 512, 64>}, {pipeline_mode = #tpu.pipeline_mode<synchronous>, transform_indices = @transform_6, window_bounds = array<i64: 1, 64>}, {pipeline_mode = #tpu.pipeline_mode<synchronous>, transform_indices = @transform_7, window_bounds = array<i64: 256, 32>}, {pipeline_mode = #tpu.pipeline_mode<synchronous>, transform_indices = @transform_8, window_bounds = array<i64: 1, 32>}, {pipeline_mode = #tpu.pipeline_mode<synchronous>, transform_indices = @transform_9, window_bounds = array<i64: 16, 32, 64>}, {pipeline_mode = #tpu.pipeline_mode<synchronous>, transform_indices = @transform_10, window_bounds = array<i64: 1, 64>}, {pipeline_mode = #tpu.pipeline_mode<synchronous>, transform_indices = @transform_11, window_bounds = array<i64: 1, 64>}, {pipeline_mode = #tpu.pipeline_mode<synchronous>, transform_indices = @transform_12, window_bounds = array<i64: 1, 1>}, {transform_indices = @transform_13, window_bounds = array<i64: 8, 1>}]} {
    %c0 = arith.constant 0 : index
    %c0_0 = arith.constant 0 : index
    %c0_1 = arith.constant 0 : index
    %0 = vector.load %arg1[%c0, %c0_0, %c0_1] : memref<1x128x4xbf16, #tpu.memory_space<vmem>>, vector<1x128x4xbf16>
    %1 = vector.shape_cast %0 : vector<1x128x4xbf16> to vector<128x4xbf16>
    %c0_2 = arith.constant 0 : index
    %c0_3 = arith.constant 0 : index
    %2 = vector.load %arg2[%c0_2, %c0_3] : memref<4x128xbf16, #tpu.memory_space<vmem>>, vector<4x128xbf16>
    %cst = arith.constant dense<0.000000e+00> : vector<128x128xf32>
    %3 = tpu.matmul %1, %2, %cst {dimension_numbers = #tpu.dot_dimension_numbers<[1], [0], [0], [1], [0, 0, 1, 1], [], []>} : vector<128x4xbf16>, vector<4x128xbf16>, vector<128x128xf32> -> vector<128x128xf32>
    %c0_4 = arith.constant 0 : index
    %c0_5 = arith.constant 0 : index
    %4 = vector.load %arg3[%c0_4, %c0_5] : memref<1x128xf32, #tpu.memory_space<vmem>>, vector<1x128xf32>
    %5 = vector.broadcast %4 : vector<1x128xf32> to vector<128x128xf32>
    %6 = arith.addf %3, %5 : vector<128x128xf32>
    %cst_6 = arith.constant 0.000000e+00 : f32
    %7 = vector.broadcast %cst_6 : f32 to vector<128x128xf32>
    %8 = arith.maximumf %6, %7 : vector<128x128xf32>
    %cst_7 = arith.constant 0.000000e+00 : f32
    %9 = vector.broadcast %cst_7 : f32 to vector<8x128xf32>
    %cst_8 = arith.constant 0.000000e+00 : f32
    %10 = vector.broadcast %cst_8 : f32 to vector<16x128xf32>
    %11 = vector.extract_strided_slice %8 {offsets = [0, 0], sizes = [120, 128], strides = [1, 1]} : vector<128x128xf32> to vector<120x128xf32>
    %12 = tpu.concatenate %9, %11 in 0 : vector<8x128xf32>, vector<120x128xf32> -> vector<128x128xf32>
    %13 = vector.extract_strided_slice %8 {offsets = [8, 0], sizes = [120, 128], strides = [1, 1]} : vector<128x128xf32> to vector<120x128xf32>
    %14 = tpu.concatenate %13, %9 in 0 : vector<120x128xf32>, vector<8x128xf32> -> vector<128x128xf32>
    %15 = vector.extract_strided_slice %8 {offsets = [16, 0], sizes = [112, 128], strides = [1, 1]} : vector<128x128xf32> to vector<112x128xf32>
    %16 = tpu.concatenate %15, %10 in 0 : vector<112x128xf32>, vector<16x128xf32> -> vector<128x128xf32>
    %17 = tpu.concatenate %12, %8, %14, %16 in 1 : vector<128x128xf32>, vector<128x128xf32>, vector<128x128xf32>, vector<128x128xf32> -> vector<128x512xf32>
    %18 = arith.truncf %17 : vector<128x512xf32> to vector<128x512xbf16>
    %c0_9 = arith.constant 0 : index
    %c0_10 = arith.constant 0 : index
    %19 = vector.load %arg4[%c0_9, %c0_10] : memref<512x128xbf16, #tpu.memory_space<vmem>>, vector<512x128xbf16>
    %cst_11 = arith.constant dense<0.000000e+00> : vector<128x128xf32>
    %20 = tpu.matmul %18, %19, %cst_11 {dimension_numbers = #tpu.dot_dimension_numbers<[1], [0], [0], [1], [0, 0, 1, 1], [], []>} : vector<128x512xbf16>, vector<512x128xbf16>, vector<128x128xf32> -> vector<128x128xf32>
    %c0_12 = arith.constant 0 : index
    %c0_13 = arith.constant 0 : index
    %21 = vector.load %arg5[%c0_12, %c0_13] : memref<1x128xf32, #tpu.memory_space<vmem>>, vector<1x128xf32>
    %22 = vector.broadcast %21 : vector<1x128xf32> to vector<128x128xf32>
    %23 = arith.addf %20, %22 : vector<128x128xf32>
    %cst_14 = arith.constant 0.000000e+00 : f32
    %24 = vector.broadcast %cst_14 : f32 to vector<128x128xf32>
    %25 = arith.maximumf %23, %24 : vector<128x128xf32>
    %cst_15 = arith.constant 0.000000e+00 : f32
    %26 = vector.broadcast %cst_15 : f32 to vector<8x128xf32>
    %cst_16 = arith.constant 0.000000e+00 : f32
    %27 = vector.broadcast %cst_16 : f32 to vector<16x128xf32>
    %28 = vector.extract_strided_slice %25 {offsets = [0, 0], sizes = [120, 128], strides = [1, 1]} : vector<128x128xf32> to vector<120x128xf32>
    %29 = tpu.concatenate %26, %28 in 0 : vector<8x128xf32>, vector<120x128xf32> -> vector<128x128xf32>
    %30 = vector.extract_strided_slice %25 {offsets = [8, 0], sizes = [120, 128], strides = [1, 1]} : vector<128x128xf32> to vector<120x128xf32>
    %31 = tpu.concatenate %30, %26 in 0 : vector<120x128xf32>, vector<8x128xf32> -> vector<128x128xf32>
    %32 = vector.extract_strided_slice %25 {offsets = [16, 0], sizes = [112, 128], strides = [1, 1]} : vector<128x128xf32> to vector<112x128xf32>
    %33 = tpu.concatenate %32, %27 in 0 : vector<112x128xf32>, vector<16x128xf32> -> vector<128x128xf32>
    %34 = tpu.concatenate %29, %25, %31, %33 in 1 : vector<128x128xf32>, vector<128x128xf32>, vector<128x128xf32>, vector<128x128xf32> -> vector<128x512xf32>
    %35 = arith.truncf %34 : vector<128x512xf32> to vector<128x512xbf16>
    %c0_17 = arith.constant 0 : index
    %c0_18 = arith.constant 0 : index
    %36 = vector.load %arg6[%c0_17, %c0_18] : memref<512x64xbf16, #tpu.memory_space<vmem>>, vector<512x64xbf16>
    %cst_19 = arith.constant dense<0.000000e+00> : vector<128x64xf32>
    %37 = tpu.matmul %35, %36, %cst_19 {dimension_numbers = #tpu.dot_dimension_numbers<[1], [0], [0], [1], [0, 0, 1, 1], [], []>} : vector<128x512xbf16>, vector<512x64xbf16>, vector<128x64xf32> -> vector<128x64xf32>
    %c0_20 = arith.constant 0 : index
    %c0_21 = arith.constant 0 : index
    %38 = vector.load %arg7[%c0_20, %c0_21] : memref<1x64xf32, #tpu.memory_space<vmem>>, vector<1x64xf32>
    %39 = vector.broadcast %38 : vector<1x64xf32> to vector<128x64xf32>
    %40 = arith.addf %37, %39 : vector<128x64xf32>
    %cst_22 = arith.constant 0.000000e+00 : f32
    %41 = vector.broadcast %cst_22 : f32 to vector<128x64xf32>
    %42 = arith.maximumf %40, %41 : vector<128x64xf32>
    %cst_23 = arith.constant 0.000000e+00 : f32
    %43 = vector.broadcast %cst_23 : f32 to vector<8x64xf32>
    %cst_24 = arith.constant 0.000000e+00 : f32
    %44 = vector.broadcast %cst_24 : f32 to vector<16x64xf32>
    %45 = vector.extract_strided_slice %42 {offsets = [0, 0], sizes = [120, 64], strides = [1, 1]} : vector<128x64xf32> to vector<120x64xf32>
    %46 = tpu.concatenate %43, %45 in 0 : vector<8x64xf32>, vector<120x64xf32> -> vector<128x64xf32>
    %47 = vector.extract_strided_slice %42 {offsets = [8, 0], sizes = [120, 64], strides = [1, 1]} : vector<128x64xf32> to vector<120x64xf32>
    %48 = tpu.concatenate %47, %43 in 0 : vector<120x64xf32>, vector<8x64xf32> -> vector<128x64xf32>
    %49 = vector.extract_strided_slice %42 {offsets = [16, 0], sizes = [112, 64], strides = [1, 1]} : vector<128x64xf32> to vector<112x64xf32>
    %50 = tpu.concatenate %49, %44 in 0 : vector<112x64xf32>, vector<16x64xf32> -> vector<128x64xf32>
    %c0_25 = arith.constant 0 : index
    %c0_26 = arith.constant 0 : index
    %51 = vector.load %arg8[%c0_25, %c0_26] : memref<256x32xbf16, #tpu.memory_space<vmem>>, vector<256x32xbf16>
    %52 = arith.truncf %46 : vector<128x64xf32> to vector<128x64xbf16>
    %53 = vector.extract_strided_slice %51 {offsets = [0, 0], sizes = [64, 32], strides = [1, 1]} : vector<256x32xbf16> to vector<64x32xbf16>
    %cst_27 = arith.constant dense<0.000000e+00> : vector<128x32xf32>
    %54 = tpu.matmul %52, %53, %cst_27 {dimension_numbers = #tpu.dot_dimension_numbers<[1], [0], [0], [1], [0, 0, 1, 1], [], []>} : vector<128x64xbf16>, vector<64x32xbf16>, vector<128x32xf32> -> vector<128x32xf32>
    %cst_28 = arith.constant 0.000000e+00 : f32
    %55 = vector.broadcast %cst_28 : f32 to vector<128x32xf32>
    %56 = arith.addf %55, %54 : vector<128x32xf32>
    %57 = arith.truncf %42 : vector<128x64xf32> to vector<128x64xbf16>
    %58 = vector.extract_strided_slice %51 {offsets = [64, 0], sizes = [64, 32], strides = [1, 1]} : vector<256x32xbf16> to vector<64x32xbf16>
    %cst_29 = arith.constant dense<0.000000e+00> : vector<128x32xf32>
    %59 = tpu.matmul %57, %58, %cst_29 {dimension_numbers = #tpu.dot_dimension_numbers<[1], [0], [0], [1], [0, 0, 1, 1], [], []>} : vector<128x64xbf16>, vector<64x32xbf16>, vector<128x32xf32> -> vector<128x32xf32>
    %60 = arith.addf %56, %59 : vector<128x32xf32>
    %61 = arith.truncf %48 : vector<128x64xf32> to vector<128x64xbf16>
    %62 = vector.extract_strided_slice %51 {offsets = [128, 0], sizes = [64, 32], strides = [1, 1]} : vector<256x32xbf16> to vector<64x32xbf16>
    %cst_30 = arith.constant dense<0.000000e+00> : vector<128x32xf32>
    %63 = tpu.matmul %61, %62, %cst_30 {dimension_numbers = #tpu.dot_dimension_numbers<[1], [0], [0], [1], [0, 0, 1, 1], [], []>} : vector<128x64xbf16>, vector<64x32xbf16>, vector<128x32xf32> -> vector<128x32xf32>
    %64 = arith.addf %60, %63 : vector<128x32xf32>
    %65 = arith.truncf %50 : vector<128x64xf32> to vector<128x64xbf16>
    %66 = vector.extract_strided_slice %51 {offsets = [192, 0], sizes = [64, 32], strides = [1, 1]} : vector<256x32xbf16> to vector<64x32xbf16>
    %cst_31 = arith.constant dense<0.000000e+00> : vector<128x32xf32>
    %67 = tpu.matmul %65, %66, %cst_31 {dimension_numbers = #tpu.dot_dimension_numbers<[1], [0], [0], [1], [0, 0, 1, 1], [], []>} : vector<128x64xbf16>, vector<64x32xbf16>, vector<128x32xf32> -> vector<128x32xf32>
    %68 = arith.addf %64, %67 : vector<128x32xf32>
    %c0_32 = arith.constant 0 : index
    %c0_33 = arith.constant 0 : index
    %69 = vector.load %arg9[%c0_32, %c0_33] : memref<1x32xf32, #tpu.memory_space<vmem>>, vector<1x32xf32>
    %70 = vector.broadcast %69 : vector<1x32xf32> to vector<128x32xf32>
    %71 = arith.addf %68, %70 : vector<128x32xf32>
    %cst_34 = arith.constant 0.000000e+00 : f32
    %72 = vector.broadcast %cst_34 : f32 to vector<128x32xf32>
    %73 = arith.maximumf %71, %72 : vector<128x32xf32>
    %74 = vector.shape_cast %73 : vector<128x32xf32> to vector<16x8x32xf32>
    %75 = arith.truncf %74 : vector<16x8x32xf32> to vector<16x8x32xbf16>
    %c0_35 = arith.constant 0 : index
    %c0_36 = arith.constant 0 : index
    %c0_37 = arith.constant 0 : index
    %76 = vector.load %arg10[%c0_35, %c0_36, %c0_37] : memref<16x32x64xbf16, #tpu.memory_space<vmem>>, vector<16x32x64xbf16>
    %cst_38 = arith.constant dense<0.000000e+00> : vector<16x8x64xf32>
    %77 = tpu.matmul %75, %76, %cst_38 {dimension_numbers = #tpu.dot_dimension_numbers<[2], [1], [1], [2], [0, 0, 0, 1, 1, 2], [0], [0]>} : vector<16x8x32xbf16>, vector<16x32x64xbf16>, vector<16x8x64xf32> -> vector<16x8x64xf32>
    %cst_39 = arith.constant dense<0.000000e+00> : vector<8x64xf32>
    %78 = vector.multi_reduction <add>, %77, %cst_39 [0] : vector<16x8x64xf32> to vector<8x64xf32>
    %c0_40 = arith.constant 0 : index
    %c0_41 = arith.constant 0 : index
    %79 = vector.load %arg11[%c0_40, %c0_41] : memref<1x64xf32, #tpu.memory_space<vmem>>, vector<1x64xf32>
    %80 = vector.broadcast %79 : vector<1x64xf32> to vector<8x64xf32>
    %81 = arith.addf %78, %80 : vector<8x64xf32>
    %cst_42 = arith.constant 0.000000e+00 : f32
    %82 = vector.broadcast %cst_42 : f32 to vector<8x64xf32>
    %83 = arith.maximumf %81, %82 : vector<8x64xf32>
    %c0_43 = arith.constant 0 : index
    %c0_44 = arith.constant 0 : index
    %84 = vector.load %arg12[%c0_43, %c0_44] : memref<1x64xf32, #tpu.memory_space<vmem>>, vector<1x64xf32>
    %85 = vector.broadcast %84 : vector<1x64xf32> to vector<8x64xf32>
    %86 = arith.mulf %83, %85 : vector<8x64xf32>
    %cst_45 = arith.constant dense<0.000000e+00> : vector<8xf32>
    %87 = vector.multi_reduction <add>, %86, %cst_45 [1] : vector<8x64xf32> to vector<8xf32>
    %88 = vector.shape_cast %87 : vector<8xf32> to vector<8x1xf32>
    %c0_46 = arith.constant 0 : index
    %c0_47 = arith.constant 0 : index
    %89 = vector.load %arg13[%c0_46, %c0_47] : memref<1x1xf32, #tpu.memory_space<vmem>>, vector<1x1xf32>
    %90 = vector.broadcast %89 : vector<1x1xf32> to vector<8x1xf32>
    %91 = arith.addf %88, %90 : vector<8x1xf32>
    %c0_48 = arith.constant 0 : index
    %c0_49 = arith.constant 0 : index
    %92 = vector.load %arg14[%c0_48, %c0_49] : memref<8x1xf32, #tpu.memory_space<vmem>>, vector<8x1xf32>
    tpu.vector_store %arg14[%c0_48, %c0_49], %91 {strides = array<i32>} : memref<8x1xf32, #tpu.memory_space<vmem>>, vector<8x1xf32>,
    return
  }
  func.func @transform_0(%arg0: i32) -> (i32, i32, i32) {
    %c0_i32 = arith.constant 0 : i32
    %c0_i32_0 = arith.constant 0 : i32
    %c0_i32_1 = arith.constant 0 : i32
    return %arg0, %c0_i32, %c0_i32_0 : i32, i32, i32
  }
  func.func @transform_1(%arg0: i32) -> (i32, i32) {
    %c0_i32 = arith.constant 0 : i32
    %c0_i32_0 = arith.constant 0 : i32
    %c0_i32_1 = arith.constant 0 : i32
    return %c0_i32, %c0_i32_0 : i32, i32
  }
  func.func @transform_2(%arg0: i32) -> (i32, i32) {
    %c0_i32 = arith.constant 0 : i32
    %c0_i32_0 = arith.constant 0 : i32
    %c0_i32_1 = arith.constant 0 : i32
    return %c0_i32, %c0_i32_0 : i32, i32
  }
  func.func @transform_3(%arg0: i32) -> (i32, i32) {
    %c0_i32 = arith.constant 0 : i32
    %c0_i32_0 = arith.constant 0 : i32
    %c0_i32_1 = arith.constant 0 : i32
    return %c0_i32, %c0_i32_0 : i32, i32
  }
  func.func @transform_4(%arg0: i32) -> (i32, i32) {
    %c0_i32 = arith.constant 0 : i32
    %c0_i32_0 = arith.constant 0 : i32
    %c0_i32_1 = arith.constant 0 : i32
    return %c0_i32, %c0_i32_0 : i32, i32
  }
  func.func @transform_5(%arg0: i32) -> (i32, i32) {
    %c0_i32 = arith.constant 0 : i32
    %c0_i32_0 = arith.constant 0 : i32
    %c0_i32_1 = arith.constant 0 : i32
    return %c0_i32, %c0_i32_0 : i32, i32
  }
  func.func @transform_6(%arg0: i32) -> (i32, i32) {
    %c0_i32 = arith.constant 0 : i32
    %c0_i32_0 = arith.constant 0 : i32
    %c0_i32_1 = arith.constant 0 : i32
    return %c0_i32, %c0_i32_0 : i32, i32
  }
  func.func @transform_7(%arg0: i32) -> (i32, i32) {
    %c0_i32 = arith.constant 0 : i32
    %c0_i32_0 = arith.constant 0 : i32
    %c0_i32_1 = arith.constant 0 : i32
    return %c0_i32, %c0_i32_0 : i32, i32
  }
  func.func @transform_8(%arg0: i32) -> (i32, i32) {
    %c0_i32 = arith.constant 0 : i32
    %c0_i32_0 = arith.constant 0 : i32
    %c0_i32_1 = arith.constant 0 : i32
    return %c0_i32, %c0_i32_0 : i32, i32
  }
  func.func @transform_9(%arg0: i32) -> (i32, i32, i32) {
    %c0_i32 = arith.constant 0 : i32
    %c0_i32_0 = arith.constant 0 : i32
    %c0_i32_1 = arith.constant 0 : i32
    %c0_i32_2 = arith.constant 0 : i32
    return %c0_i32, %c0_i32_0, %c0_i32_1 : i32, i32, i32
  }
  func.func @transform_10(%arg0: i32) -> (i32, i32) {
    %c0_i32 = arith.constant 0 : i32
    %c0_i32_0 = arith.constant 0 : i32
    %c0_i32_1 = arith.constant 0 : i32
    return %c0_i32, %c0_i32_0 : i32, i32
  }
  func.func @transform_11(%arg0: i32) -> (i32, i32) {
    %c0_i32 = arith.constant 0 : i32
    %c0_i32_0 = arith.constant 0 : i32
    %c0_i32_1 = arith.constant 0 : i32
    return %c0_i32, %c0_i32_0 : i32, i32
  }
  func.func @transform_12(%arg0: i32) -> (i32, i32) {
    %c0_i32 = arith.constant 0 : i32
    %c0_i32_0 = arith.constant 0 : i32
    %c0_i32_1 = arith.constant 0 : i32
    return %c0_i32, %c0_i32_0 : i32, i32
  }
  func.func @transform_13(%arg0: i32) -> (i32, i32) {
    %c0_i32 = arith.constant 0 : i32
    %c0_i32_0 = arith.constant 0 : i32
    return %arg0, %c0_i32 : i32, i32
  }
}

</mosaic_0001>

<llo_original>
// kernel: tpu_custom_call.1
$region0: #{tpu_custom_call.1}
  #allocation0 [shape = 'u32[]', space=smem, size = 0x4, offset = 0x4, fixed_abs, tag = 'smem constant byte address 0x4 - core index']
  #allocation1 [shape = 'u32[144,128]{1,0:T(1,128)}', space=vmem, size = 0x12000, scoped, tag = 'internal scratch']
  #allocation2 [shape = 'f32[1,1]{1,0:T(1,128)S(1)}', space=vmem, size = 0x200, scoped, tag = 'scoped memory for tpu_custom_call.1']
  %s0 = inlined_call_operand.vmem [shape: bf16[1,128,4], index: 0, kind: input, shape index: {}]
  %s1 = inlined_call_operand.vmem [shape: bf16[4,128], index: 1, kind: input, shape index: {}]
  %s2 = inlined_call_operand.vmem [shape: f32[1,128], index: 2, kind: input, shape index: {}]
  %s3 = inlined_call_operand.vmem [shape: bf16[512,128], index: 3, kind: input, shape index: {}]
  %s4 = inlined_call_operand.vmem [shape: f32[1,128], index: 4, kind: input, shape index: {}]
  %s5 = inlined_call_operand.vmem [shape: bf16[512,64], index: 5, kind: input, shape index: {}]
  %s6 = inlined_call_operand.vmem [shape: f32[1,64], index: 6, kind: input, shape index: {}]
  %s7 = inlined_call_operand.vmem [shape: bf16[256,32], index: 7, kind: input, shape index: {}]
  %s8 = inlined_call_operand.vmem [shape: f32[1,32], index: 8, kind: input, shape index: {}]
  %s9 = inlined_call_operand.vmem [shape: bf16[16,32,64], index: 9, kind: input, shape index: {}]
  %s10 = inlined_call_operand.vmem [shape: f32[1,64], index: 10, kind: input, shape index: {}]
  %s11 = inlined_call_operand.vmem [shape: f32[1,64], index: 11, kind: input, shape index: {}]
  %s12 = inlined_call_operand.<no memory space> [shape: f32[1,1], index: 12, kind: input, shape index: {}]
  %s13 = inlined_call_operand.vmem [shape: f32[8,1], index: 13, kind: output, shape index: {}]
  %s14 = sld [smem:[#allocation0]]
  $region62: #{tpu_custom_call.1} parent=0
    _
  %s16 = ssub.s32 1, %s14
  %s17 = scalar_select 0, %s16, %s14
  %v18 = vstv %s12
  %19 = vst [vmem:[#allocation2] sm:$0x1] %v18
  // Predicated region
  $region2: #{tpu_custom_call.1} parent=0 // pred_check
    _
  $region3: #{tpu_custom_call.1} parent=0 // pred_check_branch
    %21 = sbr.rel (0) target = $region5
  $region4: #{tpu_custom_call.1} parent=0 // pred_region
    _
  $region5: #{tpu_custom_call.1} parent=0 // pred_fallthru
    _
  // Predicated region
  $region6: #{tpu_custom_call.1} parent=0 // pred_check
    _
  $region7: #{tpu_custom_call.1} parent=0 // pred_check_branch
    %23 = sbr.rel (0) target = $region9
  $region8: #{tpu_custom_call.1} parent=0 // pred_region
    _
  $region9: #{tpu_custom_call.1} parent=0 // pred_fallthru
    _
  // Predicated region
  $region10: #{tpu_custom_call.1} parent=0 // pred_check
    _
  $region11: #{tpu_custom_call.1} parent=0 // pred_check_branch
    %25 = sbr.rel (0) target = $region13
  $region12: #{tpu_custom_call.1} parent=0 // pred_region
    _
  $region13: #{tpu_custom_call.1} parent=0 // pred_fallthru
    _
  // Predicated region
  $region14: #{tpu_custom_call.1} parent=0 // pred_check
    _
  $region15: #{tpu_custom_call.1} parent=0 // pred_check_branch
    %27 = sbr.rel (0) target = $region17
  $region16: #{tpu_custom_call.1} parent=0 // pred_region
    _
  $region17: #{tpu_custom_call.1} parent=0 // pred_fallthru
    _
  // Predicated region
  $region18: #{tpu_custom_call.1} parent=0 // pred_check
    _
  $region19: #{tpu_custom_call.1} parent=0 // pred_check_branch
    %29 = sbr.rel (0) target = $region21
  $region20: #{tpu_custom_call.1} parent=0 // pred_region
    _
  $region21: #{tpu_custom_call.1} parent=0 // pred_fallthru
    _
  // Predicated region
  $region22: #{tpu_custom_call.1} parent=0 // pred_check
    _
  $region23: #{tpu_custom_call.1} parent=0 // pred_check_branch
    %31 = sbr.rel (0) target = $region25
  $region24: #{tpu_custom_call.1} parent=0 // pred_region
    _
  $region25: #{tpu_custom_call.1} parent=0 // pred_fallthru
    _
  // Predicated region
  $region26: #{tpu_custom_call.1} parent=0 // pred_check
    _
  $region27: #{tpu_custom_call.1} parent=0 // pred_check_branch
    %33 = sbr.rel (0) target = $region29
  $region28: #{tpu_custom_call.1} parent=0 // pred_region
    _
  $region29: #{tpu_custom_call.1} parent=0 // pred_fallthru
    _
  // Predicated region
  $region30: #{tpu_custom_call.1} parent=0 // pred_check
    _
  $region31: #{tpu_custom_call.1} parent=0 // pred_check_branch
    %35 = sbr.rel (0) target = $region33
  $region32: #{tpu_custom_call.1} parent=0 // pred_region
    _
  $region33: #{tpu_custom_call.1} parent=0 // pred_fallthru
    _
  // Predicated region
  $region34: #{tpu_custom_call.1} parent=0 // pred_check
    _
  $region35: #{tpu_custom_call.1} parent=0 // pred_check_branch
    %37 = sbr.rel (0) target = $region37
  $region36: #{tpu_custom_call.1} parent=0 // pred_region
    _
  $region37: #{tpu_custom_call.1} parent=0 // pred_fallthru
    _
  // Predicated region
  $region38: #{tpu_custom_call.1} parent=0 // pred_check
    _
  $region39: #{tpu_custom_call.1} parent=0 // pred_check_branch
    %39 = sbr.rel (0) target = $region41
  $region40: #{tpu_custom_call.1} parent=0 // pred_region
    _
  $region41: #{tpu_custom_call.1} parent=0 // pred_fallthru
    _
  // Predicated region
  $region42: #{tpu_custom_call.1} parent=0 // pred_check
    _
  $region43: #{tpu_custom_call.1} parent=0 // pred_check_branch
    %41 = sbr.rel (0) target = $region45
  $region44: #{tpu_custom_call.1} parent=0 // pred_region
    _
  $region45: #{tpu_custom_call.1} parent=0 // pred_fallthru
    _
  // Predicated region
  $region46: #{tpu_custom_call.1} parent=0 // pred_check
    _
  $region47: #{tpu_custom_call.1} parent=0 // pred_check_branch
    %43 = sbr.rel (0) target = $region49
  $region48: #{tpu_custom_call.1} parent=0 // pred_region
    _
  $region49: #{tpu_custom_call.1} parent=0 // pred_fallthru
    _
  // Predicated region
  $region50: #{tpu_custom_call.1} parent=0 // pred_check
    _
  $region51: #{tpu_custom_call.1} parent=0 // pred_check_branch
    %45 = sbr.rel (0) target = $region53
  $region52: #{tpu_custom_call.1} parent=0 // pred_region
    _
  $region53: #{tpu_custom_call.1} parent=0 // pred_fallthru
    _
  %v47 = vld [vmem:[%s0] sm:$0xf]
  %v48 = vld [vmem:[%s0 + $0x4] sm:$0xf]
  %v49 = vld [vmem:[%s0 + $0x8] sm:$0xf]
  %v50 = vld [vmem:[%s0 + $0xc] sm:$0xf]
  %v51 = vld [vmem:[%s0 + $0x10] sm:$0xf]
  %v52 = vld [vmem:[%s0 + $0x14] sm:$0xf]
  %v53 = vld [vmem:[%s0 + $0x18] sm:$0xf]
  %v54 = vld [vmem:[%s0 + $0x1c] sm:$0xf]
  %v55 = vld [vmem:[%s0 + $0x20] sm:$0xf]
  %v56 = vld [vmem:[%s0 + $0x24] sm:$0xf]
  %v57 = vld [vmem:[%s0 + $0x28] sm:$0xf]
  %v58 = vld [vmem:[%s0 + $0x2c] sm:$0xf]
  %v59 = vld [vmem:[%s0 + $0x30] sm:$0xf]
  %v60 = vld [vmem:[%s0 + $0x34] sm:$0xf]
  %v61 = vld [vmem:[%s0 + $0x38] sm:$0xf]
  %v62 = vld [vmem:[%s0 + $0x3c] sm:$0xf]
  %v63 = vld [vmem:[%s1] sm:$0x3]
  %v64 = vld [vmem:[%s2] sm:$0x1]
  %v66 = vlaneseq
  %v67 = vshrl.u32 %v66, 7
  %v68 = vsub.s32 0, %v67
  %v69 = vrot.slane %v64, %v68
  %v87 = vunpack.c.l.b16 %v47
  %v88 = vunpack.c.l.b16 %v48
  %v89 = vunpack.c.l.b16 %v49
  %v90 = vunpack.c.l.b16 %v50
  %v91 = vunpack.c.l.b16 %v51
  %v92 = vunpack.c.l.b16 %v52
  %v93 = vunpack.c.l.b16 %v53
  %v94 = vunpack.c.l.b16 %v54
  %v95 = vunpack.c.l.b16 %v55
  %v96 = vunpack.c.l.b16 %v56
  %v97 = vunpack.c.l.b16 %v57
  %v98 = vunpack.c.l.b16 %v58
  %v99 = vunpack.c.l.b16 %v59
  %v100 = vunpack.c.l.b16 %v60
  %v101 = vunpack.c.l.b16 %v61
  %v102 = vunpack.c.l.b16 %v62
  %v103 = vpack.c.b16 %v88, %v87
  %v104 = vpack.c.b16 %v90, %v89
  %v105 = vpack.c.b16 %v92, %v91
  %v106 = vpack.c.b16 %v94, %v93
  %v107 = vpack.c.b16 %v96, %v95
  %v108 = vpack.c.b16 %v98, %v97
  %v109 = vpack.c.b16 %v100, %v99
  %v110 = vpack.c.b16 %v102, %v101
  %vm111 = vcmask 31744
  %v113 = vsel %vm111, %v103, 0
  %v116 = vsel %vm111, %v104, 0
  %v119 = vsel %vm111, %v105, 0
  %v122 = vsel %vm111, %v106, 0
  %v125 = vsel %vm111, %v107, 0
  %v128 = vsel %vm111, %v108, 0
  %v131 = vsel %vm111, %v109, 0
  %v134 = vsel %vm111, %v110, 0
  %vm136 = vcmask 1041408
  %v138 = vsel %vm136, %v63, 0
  %140 = vmatprep.subr.bf16.mxu0 0
  %141 = vmatpush1.bf16.msra.mxu0 %v138
  %142 = vmatprep.subr.bf16.mxu0 0
  %143 = vmatpush1.bf16.msra.mxu0 0
  %144 = vmatprep.subr.bf16.mxu0 0
  %145 = vmatpush1.bf16.msra.mxu0 0
  %146 = vmatprep.subr.bf16.mxu0 0
  %147 = vmatpush1.bf16.msra.mxu0 0
  %148 = vmatprep.subr.bf16.mxu0 0
  %149 = vmatpush1.bf16.msra.mxu0 0
  %150 = vmatprep.subr.bf16.mxu0 0
  %151 = vmatpush1.bf16.msra.mxu0 0
  %152 = vmatprep.subr.bf16.mxu0 0
  %153 = vmatpush1.bf16.msra.mxu0 0
  %154 = vmatprep.subr.bf16.mxu0 0
  %155 = vmatpush1.bf16.msra.mxu0 0
  %156 = vmatprep.subr.bf16.mxu0 0
  %157 = vmatpush1.bf16.msra.mxu0 0
  %158 = vmatprep.subr.bf16.mxu0 0
  %159 = vmatpush1.bf16.msra.mxu0 0
  %160 = vmatprep.subr.bf16.mxu0 0
  %161 = vmatpush1.bf16.msra.mxu0 0
  %162 = vmatprep.subr.bf16.mxu0 0
  %163 = vmatpush1.bf16.msra.mxu0 0
  %164 = vmatprep.subr.bf16.mxu0 0
  %165 = vmatpush1.bf16.msra.mxu0 0
  %166 = vmatprep.subr.bf16.mxu0 0
  %167 = vmatpush1.bf16.msra.mxu0 0
  %168 = vmatprep.subr.bf16.mxu0 0
  %169 = vmatpush1.bf16.msra.mxu0 0
  %170 = vmatprep.subr.bf16.mxu0 0
  %171 = vmatpush1.bf16.msra.mxu0 0
  %172 = vmatprep.mubr.bf16.mxu0 0
  %173 = vmatmul.mubr.bf16.gmra.mrb[0].mxu0 %v113
  %v174 = vpop.f32.mrb[0].mxu0
  %v175 = vadd.f32 %v69, %v174
  %v176 = vpop.f32.mrb[0].mxu0
  %v177 = vpop.f32.mrb[0].mxu0
  %v178 = vadd.f32 %v69, %v177
  %v179 = vpop.f32.mrb[0].mxu0
  %180 = vmatprep.mubr.bf16.mxu0 0
  %181 = vmatmul.mubr.bf16.gmra.mrb[0].mxu0 %v116
  %v182 = vpop.f32.mrb[0].mxu0
  %v183 = vadd.f32 %v69, %v182
  %v184 = vpop.f32.mrb[0].mxu0
  %v185 = vpop.f32.mrb[0].mxu0
  %v186 = vadd.f32 %v69, %v185
  %v187 = vpop.f32.mrb[0].mxu0
  %188 = vmatprep.mubr.bf16.mxu0 0
  %189 = vmatmul.mubr.bf16.gmra.mrb[0].mxu0 %v119
  %v190 = vpop.f32.mrb[0].mxu0
  %v191 = vadd.f32 %v69, %v190
  %v192 = vpop.f32.mrb[0].mxu0
  %v193 = vpop.f32.mrb[0].mxu0
  %v194 = vadd.f32 %v69, %v193
  %v195 = vpop.f32.mrb[0].mxu0
  %196 = vmatprep.mubr.bf16.mxu0 0
  %197 = vmatmul.mubr.bf16.gmra.mrb[0].mxu0 %v122
  %v198 = vpop.f32.mrb[0].mxu0
  %v199 = vadd.f32 %v69, %v198
  %v200 = vpop.f32.mrb[0].mxu0
  %v201 = vpop.f32.mrb[0].mxu0
  %v202 = vadd.f32 %v69, %v201
  %v203 = vpop.f32.mrb[0].mxu0
  %204 = vmatprep.mubr.bf16.mxu0 0
  %205 = vmatmul.mubr.bf16.gmra.mrb[0].mxu0 %v125
  %v206 = vpop.f32.mrb[0].mxu0
  %v207 = vadd.f32 %v69, %v206
  %v208 = vpop.f32.mrb[0].mxu0
  %v209 = vpop.f32.mrb[0].mxu0
  %v210 = vadd.f32 %v69, %v209
  %v211 = vpop.f32.mrb[0].mxu0
  %212 = vmatprep.mubr.bf16.mxu0 0
  %213 = vmatmul.mubr.bf16.gmra.mrb[0].mxu0 %v128
  %v214 = vpop.f32.mrb[0].mxu0
  %v215 = vadd.f32 %v69, %v214
  %v216 = vpop.f32.mrb[0].mxu0
  %v217 = vpop.f32.mrb[0].mxu0
  %v218 = vadd.f32 %v69, %v217
  %v219 = vpop.f32.mrb[0].mxu0
  %220 = vmatprep.mubr.bf16.mxu0 0
  %221 = vmatmul.mubr.bf16.gmra.mrb[0].mxu0 %v131
  %v222 = vpop.f32.mrb[0].mxu0
  %v223 = vadd.f32 %v69, %v222
  %v224 = vpop.f32.mrb[0].mxu0
  %v225 = vpop.f32.mrb[0].mxu0
  %v226 = vadd.f32 %v69, %v225
  %v227 = vpop.f32.mrb[0].mxu0
  %228 = vmatprep.mubr.bf16.mxu0 0
  %229 = vmatmul.mubr.bf16.gmra.mrb[0].mxu0 %v134
  %v230 = vpop.f32.mrb[0].mxu0
  %v231 = vadd.f32 %v69, %v230
  %v232 = vpop.f32.mrb[0].mxu0
  %v233 = vpop.f32.mrb[0].mxu0
  %v234 = vadd.f32 %v69, %v233
  %v235 = vpop.f32.mrb[0].mxu0
  %236 = vdwg.mxu0
  %v237 = vmax.f32 %v175, 0.0
  %v238 = vmax.f32 %v178, 0.0
  %v239 = vmax.f32 %v183, 0.0
  %v240 = vmax.f32 %v186, 0.0
  %v241 = vmax.f32 %v191, 0.0
  %v242 = vmax.f32 %v194, 0.0
  %v243 = vmax.f32 %v199, 0.0
  %v244 = vmax.f32 %v202, 0.0
  %v245 = vmax.f32 %v207, 0.0
  %v246 = vmax.f32 %v210, 0.0
  %v247 = vmax.f32 %v215, 0.0
  %v248 = vmax.f32 %v218, 0.0
  %v249 = vmax.f32 %v223, 0.0
  %v250 = vmax.f32 %v226, 0.0
  %v251 = vmax.f32 %v231, 0.0
  %v252 = vmax.f32 %v234, 0.0
  %v253 = vpack.c.bf16 %v237, 0.0
  %v254 = vpack.c.bf16 %v238, %v237
  %v255 = vpack.c.bf16 %v239, %v238
  %v256 = vpack.c.bf16 %v240, %v239
  %v257 = vpack.c.bf16 %v241, %v240
  %v258 = vpack.c.bf16 %v242, %v241
  %v259 = vpack.c.bf16 %v243, %v242
  %v260 = vpack.c.bf16 %v244, %v243
  %v261 = vpack.c.bf16 %v245, %v244
  %v262 = vpack.c.bf16 %v246, %v245
  %v263 = vpack.c.bf16 %v247, %v246
  %v264 = vpack.c.bf16 %v248, %v247
  %v265 = vpack.c.bf16 %v249, %v248
  %v266 = vpack.c.bf16 %v250, %v249
  %v267 = vpack.c.bf16 %v251, %v250
  %v268 = vpack.c.bf16 %v252, %v251
  %v269 = vpack.c.bf16 0.0, %v252
  %v270 = vpack.c.bf16 0.0, 0.0
  %v271 = vld [vmem:[%s3] sm:$0xf]
  %v272 = vld [vmem:[%s3 + $0x4] sm:$0xf]
  %v273 = vld [vmem:[%s3 + $0x8] sm:$0xf]
  %v274 = vld [vmem:[%s3 + $0xc] sm:$0xf]
  %v275 = vld [vmem:[%s3 + $0x10] sm:$0xf]
  %v276 = vld [vmem:[%s3 + $0x14] sm:$0xf]
  %v277 = vld [vmem:[%s3 + $0x18] sm:$0xf]
  %v278 = vld [vmem:[%s3 + $0x1c] sm:$0xf]
  %v279 = vld [vmem:[%s3 + $0x20] sm:$0xf]
  %v280 = vld [vmem:[%s3 + $0x24] sm:$0xf]
  %v281 = vld [vmem:[%s3 + $0x28] sm:$0xf]
  %v282 = vld [vmem:[%s3 + $0x2c] sm:$0xf]
  %v283 = vld [vmem:[%s3 + $0x30] sm:$0xf]
  %v284 = vld [vmem:[%s3 + $0x34] sm:$0xf]
  %v285 = vld [vmem:[%s3 + $0x38] sm:$0xf]
  %v286 = vld [vmem:[%s3 + $0x3c] sm:$0xf]
  %v287 = vld [vmem:[%s3 + $0x40] sm:$0xf]
  %v288 = vld [vmem:[%s3 + $0x44] sm:$0xf]
  %v289 = vld [vmem:[%s3 + $0x48] sm:$0xf]
  %v290 = vld [vmem:[%s3 + $0x4c] sm:$0xf]
  %v291 = vld [vmem:[%s3 + $0x50] sm:$0xf]
  %v292 = vld [vmem:[%s3 + $0x54] sm:$0xf]
  %v293 = vld [vmem:[%s3 + $0x58] sm:$0xf]
  %v294 = vld [vmem:[%s3 + $0x5c] sm:$0xf]
  %v295 = vld [vmem:[%s3 + $0x60] sm:$0xf]
  %v296 = vld [vmem:[%s3 + $0x64] sm:$0xf]
  %v297 = vld [vmem:[%s3 + $0x68] sm:$0xf]
  %v298 = vld [vmem:[%s3 + $0x6c] sm:$0xf]
  %v299 = vld [vmem:[%s3 + $0x70] sm:$0xf]
  %v300 = vld [vmem:[%s3 + $0x74] sm:$0xf]
  %v301 = vld [vmem:[%s3 + $0x78] sm:$0xf]
  %v302 = vld [vmem:[%s3 + $0x7c] sm:$0xf]
  %v303 = vld [vmem:[%s3 + $0x80] sm:$0xf]
  %v304 = vld [vmem:[%s3 + $0x84] sm:$0xf]
  %v305 = vld [vmem:[%s3 + $0x88] sm:$0xf]
  %v306 = vld [vmem:[%s3 + $0x8c] sm:$0xf]
  %v307 = vld [vmem:[%s3 + $0x90] sm:$0xf]
  %v308 = vld [vmem:[%s3 + $0x94] sm:$0xf]
  %v309 = vld [vmem:[%s3 + $0x98] sm:$0xf]
  %v310 = vld [vmem:[%s3 + $0x9c] sm:$0xf]
  %v311 = vld [vmem:[%s3 + $0xa0] sm:$0xf]
  %v312 = vld [vmem:[%s3 + $0xa4] sm:$0xf]
  %v313 = vld [vmem:[%s3 + $0xa8] sm:$0xf]
  %v314 = vld [vmem:[%s3 + $0xac] sm:$0xf]
  %v315 = vld [vmem:[%s3 + $0xb0] sm:$0xf]
  %v316 = vld [vmem:[%s3 + $0xb4] sm:$0xf]
  %v317 = vld [vmem:[%s3 + $0xb8] sm:$0xf]
  %v318 = vld [vmem:[%s3 + $0xbc] sm:$0xf]
  %v319 = vld [vmem:[%s3 + $0xc0] sm:$0xf]
  %v320 = vld [vmem:[%s3 + $0xc4] sm:$0xf]
  %v321 = vld [vmem:[%s3 + $0xc8] sm:$0xf]
  %v322 = vld [vmem:[%s3 + $0xcc] sm:$0xf]
  %v323 = vld [vmem:[%s3 + $0xd0] sm:$0xf]
  %v324 = vld [vmem:[%s3 + $0xd4] sm:$0xf]
  %v325 = vld [vmem:[%s3 + $0xd8] sm:$0xf]
  %v326 = vld [vmem:[%s3 + $0xdc] sm:$0xf]
  %v327 = vld [vmem:[%s3 + $0xe0] sm:$0xf]
  %v328 = vld [vmem:[%s3 + $0xe4] sm:$0xf]
  %v329 = vld [vmem:[%s3 + $0xe8] sm:$0xf]
  %v330 = vld [vmem:[%s3 + $0xec] sm:$0xf]
  %v331 = vld [vmem:[%s3 + $0xf0] sm:$0xf]
  %v332 = vld [vmem:[%s3 + $0xf4] sm:$0xf]
  %v333 = vld [vmem:[%s3 + $0xf8] sm:$0xf]
  %v334 = vld [vmem:[%s3 + $0xfc] sm:$0xf]
  %v335 = vld [vmem:[%s4] sm:$0x1]
  %v337 = vlaneseq
  %v338 = vshrl.u32 %v337, 7
  %v339 = vsub.s32 0, %v338
  %v340 = vrot.slane %v335, %v339
  %v406 = vunpack.c.l.b16 %v271
  %v407 = vunpack.c.l.b16 %v272
  %v408 = vunpack.c.l.b16 %v273
  %v409 = vunpack.c.l.b16 %v274
  %v410 = vunpack.c.l.b16 %v275
  %v411 = vunpack.c.l.b16 %v276
  %v412 = vunpack.c.l.b16 %v277
  %v413 = vunpack.c.l.b16 %v278
  %v414 = vunpack.c.l.b16 %v279
  %v415 = vunpack.c.l.b16 %v280
  %v416 = vunpack.c.l.b16 %v281
  %v417 = vunpack.c.l.b16 %v282
  %v418 = vunpack.c.l.b16 %v283
  %v419 = vunpack.c.l.b16 %v284
  %v420 = vunpack.c.l.b16 %v285
  %v421 = vunpack.c.l.b16 %v286
  %v422 = vunpack.c.l.b16 %v287
  %v423 = vunpack.c.l.b16 %v288
  %v424 = vunpack.c.l.b16 %v289
  %v425 = vunpack.c.l.b16 %v290
  %v426 = vunpack.c.l.b16 %v291
  %v427 = vunpack.c.l.b16 %v292
  %v428 = vunpack.c.l.b16 %v293
  %v429 = vunpack.c.l.b16 %v294
  %v430 = vunpack.c.l.b16 %v295
  %v431 = vunpack.c.l.b16 %v296
  %v432 = vunpack.c.l.b16 %v297
  %v433 = vunpack.c.l.b16 %v298
  %v434 = vunpack.c.l.b16 %v299
  %v435 = vunpack.c.l.b16 %v300
  %v436 = vunpack.c.l.b16 %v301
  %v437 = vunpack.c.l.b16 %v302
  %v438 = vunpack.c.l.b16 %v303
  %v439 = vunpack.c.l.b16 %v304
  %v440 = vunpack.c.l.b16 %v305
  %v441 = vunpack.c.l.b16 %v306
  %v442 = vunpack.c.l.b16 %v307
  %v443 = vunpack.c.l.b16 %v308
  %v444 = vunpack.c.l.b16 %v309
  %v445 = vunpack.c.l.b16 %v310
  %v446 = vunpack.c.l.b16 %v311
  %v447 = vunpack.c.l.b16 %v312
  %v448 = vunpack.c.l.b16 %v313
  %v449 = vunpack.c.l.b16 %v314
  %v450 = vunpack.c.l.b16 %v315
  %v451 = vunpack.c.l.b16 %v316
  %v452 = vunpack.c.l.b16 %v317
  %v453 = vunpack.c.l.b16 %v318
  %v454 = vunpack.c.l.b16 %v319
  %v455 = vunpack.c.l.b16 %v320
  %v456 = vunpack.c.l.b16 %v321
  %v457 = vunpack.c.l.b16 %v322
  %v458 = vunpack.c.l.b16 %v323
  %v459 = vunpack.c.l.b16 %v324
  %v460 = vunpack.c.l.b16 %v325
  %v461 = vunpack.c.l.b16 %v326
  %v462 = vunpack.c.l.b16 %v327
  %v463 = vunpack.c.l.b16 %v328
  %v464 = vunpack.c.l.b16 %v329
  %v465 = vunpack.c.l.b16 %v330
  %v466 = vunpack.c.l.b16 %v331
  %v467 = vunpack.c.l.b16 %v332
  %v468 = vunpack.c.l.b16 %v333
  %v469 = vunpack.c.l.b16 %v334
  %v470 = vpack.c.b16 %v407, %v406
  %v471 = vpack.c.b16 %v409, %v408
  %v472 = vpack.c.b16 %v411, %v410
  %v473 = vpack.c.b16 %v413, %v412
  %v474 = vpack.c.b16 %v415, %v414
  %v475 = vpack.c.b16 %v417, %v416
  %v476 = vpack.c.b16 %v419, %v418
  %v477 = vpack.c.b16 %v421, %v420
  %v478 = vpack.c.b16 %v423, %v422
  %v479 = vpack.c.b16 %v425, %v424
  %v480 = vpack.c.b16 %v427, %v426
  %v481 = vpack.c.b16 %v429, %v428
  %v482 = vpack.c.b16 %v431, %v430
  %v483 = vpack.c.b16 %v433, %v432
  %v484 = vpack.c.b16 %v435, %v434
  %v485 = vpack.c.b16 %v437, %v436
  %v486 = vpack.c.b16 %v439, %v438
  %v487 = vpack.c.b16 %v441, %v440
  %v488 = vpack.c.b16 %v443, %v442
  %v489 = vpack.c.b16 %v445, %v444
  %v490 = vpack.c.b16 %v447, %v446
  %v491 = vpack.c.b16 %v449, %v448
  %v492 = vpack.c.b16 %v451, %v450
  %v493 = vpack.c.b16 %v453, %v452
  %v494 = vpack.c.b16 %v455, %v454
  %v495 = vpack.c.b16 %v457, %v456
  %v496 = vpack.c.b16 %v459, %v458
  %v497 = vpack.c.b16 %v461, %v460
  %v498 = vpack.c.b16 %v463, %v462
  %v499 = vpack.c.b16 %v465, %v464
  %v500 = vpack.c.b16 %v467, %v466
  %v501 = vpack.c.b16 %v469, %v468
  %534 = vmatprep.subr.bf16.mxu0 0
  %535 = vmatpush1.bf16.msra.mxu0 %v470
  %536 = vmatprep.subr.bf16.mxu0 0
  %537 = vmatpush1.bf16.msra.mxu0 %v471
  %538 = vmatprep.subr.bf16.mxu0 0
  %539 = vmatpush1.bf16.msra.mxu0 %v472
  %540 = vmatprep.subr.bf16.mxu0 0
  %541 = vmatpush1.bf16.msra.mxu0 %v473
  %542 = vmatprep.subr.bf16.mxu0 0
  %543 = vmatpush1.bf16.msra.mxu0 %v474
  %544 = vmatprep.subr.bf16.mxu0 0
  %545 = vmatpush1.bf16.msra.mxu0 %v475
  %546 = vmatprep.subr.bf16.mxu0 0
  %547 = vmatpush1.bf16.msra.mxu0 %v476
  %548 = vmatprep.subr.bf16.mxu0 0
  %549 = vmatpush1.bf16.msra.mxu0 %v477
  %550 = vmatprep.subr.bf16.mxu0 0
  %551 = vmatpush1.bf16.msra.mxu0 %v478
  %552 = vmatprep.subr.bf16.mxu0 0
  %553 = vmatpush1.bf16.msra.mxu0 %v479
  %554 = vmatprep.subr.bf16.mxu0 0
  %555 = vmatpush1.bf16.msra.mxu0 %v480
  %556 = vmatprep.subr.bf16.mxu0 0
  %557 = vmatpush1.bf16.msra.mxu0 %v481
  %558 = vmatprep.subr.bf16.mxu0 0
  %559 = vmatpush1.bf16.msra.mxu0 %v482
  %560 = vmatprep.subr.bf16.mxu0 0
  %561 = vmatpush1.bf16.msra.mxu0 %v483
  %562 = vmatprep.subr.bf16.mxu0 0
  %563 = vmatpush1.bf16.msra.mxu0 %v484
  %564 = vmatprep.subr.bf16.mxu0 0
  %565 = vmatpush1.bf16.msra.mxu0 %v485
  %566 = vmatprep.mubr.bf16.mxu0 %v254
  %567 = vmatmul.mubr.bf16.gmra.mrb[0].mxu0 %v253
  %v568 = vpop.f32.mrb[0].mxu0
  %v569 = vadd.f32 %v340, %v568
  %v570 = vpop.f32.mrb[0].mxu0
  %v571 = vpop.f32.mrb[0].mxu0
  %v572 = vadd.f32 %v340, %v571
  %v573 = vpop.f32.mrb[0].mxu0
  %574 = vmatprep.mubr.bf16.mxu0 %v256
  %575 = vmatmul.mubr.bf16.gmra.mrb[0].mxu0 %v255
  %v576 = vpop.f32.mrb[0].mxu0
  %v577 = vadd.f32 %v340, %v576
  %v578 = vpop.f32.mrb[0].mxu0
  %v579 = vpop.f32.mrb[0].mxu0
  %v580 = vadd.f32 %v340, %v579
  %v581 = vpop.f32.mrb[0].mxu0
  %582 = vmatprep.mubr.bf16.mxu0 %v258
  %583 = vmatmul.mubr.bf16.gmra.mrb[0].mxu0 %v257
  %v584 = vpop.f32.mrb[0].mxu0
  %v585 = vadd.f32 %v340, %v584
  %v586 = vpop.f32.mrb[0].mxu0
  %v587 = vpop.f32.mrb[0].mxu0
  %v588 = vadd.f32 %v340, %v587
  %v589 = vpop.f32.mrb[0].mxu0
  %590 = vmatprep.mubr.bf16.mxu0 %v260
  %591 = vmatmul.mubr.bf16.gmra.mrb[0].mxu0 %v259
  %v592 = vpop.f32.mrb[0].mxu0
  %v593 = vadd.f32 %v340, %v592
  %v594 = vpop.f32.mrb[0].mxu0
  %v595 = vpop.f32.mrb[0].mxu0
  %v596 = vadd.f32 %v340, %v595
  %v597 = vpop.f32.mrb[0].mxu0
  %598 = vmatprep.mubr.bf16.mxu0 %v262
  %599 = vmatmul.mubr.bf16.gmra.mrb[0].mxu0 %v261
  %v600 = vpop.f32.mrb[0].mxu0
  %v601 = vadd.f32 %v340, %v600
  %v602 = vpop.f32.mrb[0].mxu0
  %v603 = vpop.f32.mrb[0].mxu0
  %v604 = vadd.f32 %v340, %v603
  %v605 = vpop.f32.mrb[0].mxu0
  %606 = vmatprep.mubr.bf16.mxu0 %v264
  %607 = vmatmul.mubr.bf16.gmra.mrb[0].mxu0 %v263
  %v608 = vpop.f32.mrb[0].mxu0
  %v609 = vadd.f32 %v340, %v608
  %v610 = vpop.f32.mrb[0].mxu0
  %v611 = vpop.f32.mrb[0].mxu0
  %v612 = vadd.f32 %v340, %v611
  %v613 = vpop.f32.mrb[0].mxu0
  %614 = vmatprep.mubr.bf16.mxu0 %v266
  %615 = vmatmul.mubr.bf16.gmra.mrb[0].mxu0 %v265
  %v616 = vpop.f32.mrb[0].mxu0
  %v617 = vadd.f32 %v340, %v616
  %v618 = vpop.f32.mrb[0].mxu0
  %v619 = vpop.f32.mrb[0].mxu0
  %v620 = vadd.f32 %v340, %v619
  %v621 = vpop.f32.mrb[0].mxu0
  %622 = vmatprep.mubr.bf16.mxu0 %v268
  %623 = vmatmul.mubr.bf16.gmra.mrb[0].mxu0 %v267
  %v624 = vpop.f32.mrb[0].mxu0
  %v625 = vadd.f32 %v340, %v624
  %v626 = vpop.f32.mrb[0].mxu0
  %v627 = vpop.f32.mrb[0].mxu0
  %v628 = vadd.f32 %v340, %v627
  %v629 = vpop.f32.mrb[0].mxu0
  %630 = vdwg.mxu0
  %631 = vmatprep.subr.bf16.mxu0 0
  %632 = vmatpush1.bf16.msra.mxu0 %v486
  %633 = vmatprep.subr.bf16.mxu0 0
  %634 = vmatpush1.bf16.msra.mxu0 %v487
  %635 = vmatprep.subr.bf16.mxu0 0
  %636 = vmatpush1.bf16.msra.mxu0 %v488
  %637 = vmatprep.subr.bf16.mxu0 0
  %638 = vmatpush1.bf16.msra.mxu0 %v489
  %639 = vmatprep.subr.bf16.mxu0 0
  %640 = vmatpush1.bf16.msra.mxu0 %v490
  %641 = vmatprep.subr.bf16.mxu0 0
  %642 = vmatpush1.bf16.msra.mxu0 %v491
  %643 = vmatprep.subr.bf16.mxu0 0
  %644 = vmatpush1.bf16.msra.mxu0 %v492
  %645 = vmatprep.subr.bf16.mxu0 0
  %646 = vmatpush1.bf16.msra.mxu0 %v493
  %647 = vmatprep.subr.bf16.mxu0 0
  %648 = vmatpush1.bf16.msra.mxu0 %v494
  %649 = vmatprep.subr.bf16.mxu0 0
  %650 = vmatpush1.bf16.msra.mxu0 %v495
  %651 = vmatprep.subr.bf16.mxu0 0
  %652 = vmatpush1.bf16.msra.mxu0 %v496
  %653 = vmatprep.subr.bf16.mxu0 0
  %654 = vmatpush1.bf16.msra.mxu0 %v497
  %655 = vmatprep.subr.bf16.mxu0 0
  %656 = vmatpush1.bf16.msra.mxu0 %v498
  %657 = vmatprep.subr.bf16.mxu0 0
  %658 = vmatpush1.bf16.msra.mxu0 %v499
  %659 = vmatprep.subr.bf16.mxu0 0
  %660 = vmatpush1.bf16.msra.mxu0 %v500
  %661 = vmatprep.subr.bf16.mxu0 0
  %662 = vmatpush1.bf16.msra.mxu0 %v501
  %663 = vmatprep.mubr.bf16.mxu0 %v256
  %664 = vmatmul.mubr.bf16.gmra.mrb[0].mxu0 %v255
  %v665 = vpop.f32.mrb[0].mxu0
  %v666 = vadd.f32 %v569, %v665
  %v667 = vpop.f32.mrb[0].mxu0
  %v668 = vpop.f32.mrb[0].mxu0
  %v669 = vadd.f32 %v572, %v668
  %v670 = vpop.f32.mrb[0].mxu0
  %671 = vmatprep.mubr.bf16.mxu0 %v258
  %672 = vmatmul.mubr.bf16.gmra.mrb[0].mxu0 %v257
  %v673 = vpop.f32.mrb[0].mxu0
  %v674 = vadd.f32 %v577, %v673
  %v675 = vpop.f32.mrb[0].mxu0
  %v676 = vpop.f32.mrb[0].mxu0
  %v677 = vadd.f32 %v580, %v676
  %v678 = vpop.f32.mrb[0].mxu0
  %679 = vmatprep.mubr.bf16.mxu0 %v260
  %680 = vmatmul.mubr.bf16.gmra.mrb[0].mxu0 %v259
  %v681 = vpop.f32.mrb[0].mxu0
  %v682 = vadd.f32 %v585, %v681
  %v683 = vpop.f32.mrb[0].mxu0
  %v684 = vpop.f32.mrb[0].mxu0
  %v685 = vadd.f32 %v588, %v684
  %v686 = vpop.f32.mrb[0].mxu0
  %687 = vmatprep.mubr.bf16.mxu0 %v262
  %688 = vmatmul.mubr.bf16.gmra.mrb[0].mxu0 %v261
  %v689 = vpop.f32.mrb[0].mxu0
  %v690 = vadd.f32 %v593, %v689
  %v691 = vpop.f32.mrb[0].mxu0
  %v692 = vpop.f32.mrb[0].mxu0
  %v693 = vadd.f32 %v596, %v692
  %v694 = vpop.f32.mrb[0].mxu0
  %695 = vmatprep.mubr.bf16.mxu0 %v264
  %696 = vmatmul.mubr.bf16.gmra.mrb[0].mxu0 %v263
  %v697 = vpop.f32.mrb[0].mxu0
  %v698 = vadd.f32 %v601, %v697
  %v699 = vpop.f32.mrb[0].mxu0
  %v700 = vpop.f32.mrb[0].mxu0
  %v701 = vadd.f32 %v604, %v700
  %v702 = vpop.f32.mrb[0].mxu0
  %703 = vmatprep.mubr.bf16.mxu0 %v266
  %704 = vmatmul.mubr.bf16.gmra.mrb[0].mxu0 %v265
  %v705 = vpop.f32.mrb[0].mxu0
  %v706 = vadd.f32 %v609, %v705
  %v707 = vpop.f32.mrb[0].mxu0
  %v708 = vpop.f32.mrb[0].mxu0
  %v709 = vadd.f32 %v612, %v708
  %v710 = vpop.f32.mrb[0].mxu0
  %711 = vmatprep.mubr.bf16.mxu0 %v268
  %712 = vmatmul.mubr.bf16.gmra.mrb[0].mxu0 %v267
  %v713 = vpop.f32.mrb[0].mxu0
  %v714 = vadd.f32 %v617, %v713
  %v715 = vpop.f32.mrb[0].mxu0
  %v716 = vpop.f32.mrb[0].mxu0
  %v717 = vadd.f32 %v620, %v716
  %v718 = vpop.f32.mrb[0].mxu0
  %719 = vmatprep.mubr.bf16.mxu0 %v270
  %720 = vmatmul.mubr.bf16.gmra.mrb[0].mxu0 %v269
  %v721 = vpop.f32.mrb[0].mxu0
  %v722 = vadd.f32 %v625, %v721
  %v723 = vpop.f32.mrb[0].mxu0
  %v724 = vpop.f32.mrb[0].mxu0
  %v725 = vadd.f32 %v628, %v724
  %v726 = vpop.f32.mrb[0].mxu0
  %727 = vdwg.mxu0
  %v728 = vmax.f32 %v666, 0.0
  %v729 = vmax.f32 %v669, 0.0
  %v730 = vmax.f32 %v674, 0.0
  %v731 = vmax.f32 %v677, 0.0
  %v732 = vmax.f32 %v682, 0.0
  %v733 = vmax.f32 %v685, 0.0
  %v734 = vmax.f32 %v690, 0.0
  %v735 = vmax.f32 %v693, 0.0
  %v736 = vmax.f32 %v698, 0.0
  %v737 = vmax.f32 %v701, 0.0
  %v738 = vmax.f32 %v706, 0.0
  %v739 = vmax.f32 %v709, 0.0
  %v740 = vmax.f32 %v714, 0.0
  %v741 = vmax.f32 %v717, 0.0
  %v742 = vmax.f32 %v722, 0.0
  %v743 = vmax.f32 %v725, 0.0
  %v744 = vpack.c.bf16 %v728, 0.0
  %v745 = vpack.c.bf16 %v729, %v728
  %v746 = vpack.c.bf16 %v730, %v729
  %v747 = vpack.c.bf16 %v731, %v730
  %v748 = vpack.c.bf16 %v732, %v731
  %v749 = vpack.c.bf16 %v733, %v732
  %v750 = vpack.c.bf16 %v734, %v733
  %v751 = vpack.c.bf16 %v735, %v734
  %v752 = vpack.c.bf16 %v736, %v735
  %v753 = vpack.c.bf16 %v737, %v736
  %v754 = vpack.c.bf16 %v738, %v737
  %v755 = vpack.c.bf16 %v739, %v738
  %v756 = vpack.c.bf16 %v740, %v739
  %v757 = vpack.c.bf16 %v741, %v740
  %v758 = vpack.c.bf16 %v742, %v741
  %v759 = vpack.c.bf16 %v743, %v742
  %v760 = vpack.c.bf16 0.0, %v743
  %v761 = vld [vmem:[%s5] sm:$0xf]
  %v762 = vld [vmem:[%s5 + $0x4] sm:$0xf]
  %v763 = vld [vmem:[%s5 + $0x8] sm:$0xf]
  %v764 = vld [vmem:[%s5 + $0xc] sm:$0xf]
  %v765 = vld [vmem:[%s5 + $0x10] sm:$0xf]
  %v766 = vld [vmem:[%s5 + $0x14] sm:$0xf]
  %v767 = vld [vmem:[%s5 + $0x18] sm:$0xf]
  %v768 = vld [vmem:[%s5 + $0x1c] sm:$0xf]
  %v769 = vld [vmem:[%s5 + $0x20] sm:$0xf]
  %v770 = vld [vmem:[%s5 + $0x24] sm:$0xf]
  %v771 = vld [vmem:[%s5 + $0x28] sm:$0xf]
  %v772 = vld [vmem:[%s5 + $0x2c] sm:$0xf]
  %v773 = vld [vmem:[%s5 + $0x30] sm:$0xf]
  %v774 = vld [vmem:[%s5 + $0x34] sm:$0xf]
  %v775 = vld [vmem:[%s5 + $0x38] sm:$0xf]
  %v776 = vld [vmem:[%s5 + $0x3c] sm:$0xf]
  %v777 = vld [vmem:[%s5 + $0x40] sm:$0xf]
  %v778 = vld [vmem:[%s5 + $0x44] sm:$0xf]
  %v779 = vld [vmem:[%s5 + $0x48] sm:$0xf]
  %v780 = vld [vmem:[%s5 + $0x4c] sm:$0xf]
  %v781 = vld [vmem:[%s5 + $0x50] sm:$0xf]
  %v782 = vld [vmem:[%s5 + $0x54] sm:$0xf]
  %v783 = vld [vmem:[%s5 + $0x58] sm:$0xf]
  %v784 = vld [vmem:[%s5 + $0x5c] sm:$0xf]
  %v785 = vld [vmem:[%s5 + $0x60] sm:$0xf]
  %v786 = vld [vmem:[%s5 + $0x64] sm:$0xf]
  %v787 = vld [vmem:[%s5 + $0x68] sm:$0xf]
  %v788 = vld [vmem:[%s5 + $0x6c] sm:$0xf]
  %v789 = vld [vmem:[%s5 + $0x70] sm:$0xf]
  %v790 = vld [vmem:[%s5 + $0x74] sm:$0xf]
  %v791 = vld [vmem:[%s5 + $0x78] sm:$0xf]
  %v792 = vld [vmem:[%s5 + $0x7c] sm:$0xf]
  %v793 = vld [vmem:[%s5 + $0x80] sm:$0xf]
  %v794 = vld [vmem:[%s5 + $0x84] sm:$0xf]
  %v795 = vld [vmem:[%s5 + $0x88] sm:$0xf]
  %v796 = vld [vmem:[%s5 + $0x8c] sm:$0xf]
  %v797 = vld [vmem:[%s5 + $0x90] sm:$0xf]
  %v798 = vld [vmem:[%s5 + $0x94] sm:$0xf]
  %v799 = vld [vmem:[%s5 + $0x98] sm:$0xf]
  %v800 = vld [vmem:[%s5 + $0x9c] sm:$0xf]
  %v801 = vld [vmem:[%s5 + $0xa0] sm:$0xf]
  %v802 = vld [vmem:[%s5 + $0xa4] sm:$0xf]
  %v803 = vld [vmem:[%s5 + $0xa8] sm:$0xf]
  %v804 = vld [vmem:[%s5 + $0xac] sm:$0xf]
  %v805 = vld [vmem:[%s5 + $0xb0] sm:$0xf]
  %v806 = vld [vmem:[%s5 + $0xb4] sm:$0xf]
  %v807 = vld [vmem:[%s5 + $0xb8] sm:$0xf]
  %v808 = vld [vmem:[%s5 + $0xbc] sm:$0xf]
  %v809 = vld [vmem:[%s5 + $0xc0] sm:$0xf]
  %v810 = vld [vmem:[%s5 + $0xc4] sm:$0xf]
  %v811 = vld [vmem:[%s5 + $0xc8] sm:$0xf]
  %v812 = vld [vmem:[%s5 + $0xcc] sm:$0xf]
  %v813 = vld [vmem:[%s5 + $0xd0] sm:$0xf]
  %v814 = vld [vmem:[%s5 + $0xd4] sm:$0xf]
  %v815 = vld [vmem:[%s5 + $0xd8] sm:$0xf]
  %v816 = vld [vmem:[%s5 + $0xdc] sm:$0xf]
  %v817 = vld [vmem:[%s5 + $0xe0] sm:$0xf]
  %v818 = vld [vmem:[%s5 + $0xe4] sm:$0xf]
  %v819 = vld [vmem:[%s5 + $0xe8] sm:$0xf]
  %v820 = vld [vmem:[%s5 + $0xec] sm:$0xf]
  %v821 = vld [vmem:[%s5 + $0xf0] sm:$0xf]
  %v822 = vld [vmem:[%s5 + $0xf4] sm:$0xf]
  %v823 = vld [vmem:[%s5 + $0xf8] sm:$0xf]
  %v824 = vld [vmem:[%s5 + $0xfc] sm:$0xf]
  %v825 = vld [vmem:[%s6] sm:$0x1]
  %v827 = vlaneseq
  %v828 = vshrl.u32 %v827, 7
  %v829 = vsub.s32 0, %v828
  %v830 = vrot.slane %v825, %v829
  %v896 = vunpack.c.l.b16 %v761
  %v897 = vunpack.c.l.b16 %v762
  %v898 = vunpack.c.l.b16 %v763
  %v899 = vunpack.c.l.b16 %v764
  %v900 = vunpack.c.l.b16 %v765
  %v901 = vunpack.c.l.b16 %v766
  %v902 = vunpack.c.l.b16 %v767
  %v903 = vunpack.c.l.b16 %v768
  %v904 = vunpack.c.l.b16 %v769
  %v905 = vunpack.c.l.b16 %v770
  %v906 = vunpack.c.l.b16 %v771
  %v907 = vunpack.c.l.b16 %v772
  %v908 = vunpack.c.l.b16 %v773
  %v909 = vunpack.c.l.b16 %v774
  %v910 = vunpack.c.l.b16 %v775
  %v911 = vunpack.c.l.b16 %v776
  %v912 = vunpack.c.l.b16 %v777
  %v913 = vunpack.c.l.b16 %v778
  %v914 = vunpack.c.l.b16 %v779
  %v915 = vunpack.c.l.b16 %v780
  %v916 = vunpack.c.l.b16 %v781
  %v917 = vunpack.c.l.b16 %v782
  %v918 = vunpack.c.l.b16 %v783
  %v919 = vunpack.c.l.b16 %v784
  %v920 = vunpack.c.l.b16 %v785
  %v921 = vunpack.c.l.b16 %v786
  %v922 = vunpack.c.l.b16 %v787
  %v923 = vunpack.c.l.b16 %v788
  %v924 = vunpack.c.l.b16 %v789
  %v925 = vunpack.c.l.b16 %v790
  %v926 = vunpack.c.l.b16 %v791
  %v927 = vunpack.c.l.b16 %v792
  %v928 = vunpack.c.l.b16 %v793
  %v929 = vunpack.c.l.b16 %v794
  %v930 = vunpack.c.l.b16 %v795
  %v931 = vunpack.c.l.b16 %v796
  %v932 = vunpack.c.l.b16 %v797
  %v933 = vunpack.c.l.b16 %v798
  %v934 = vunpack.c.l.b16 %v799
  %v935 = vunpack.c.l.b16 %v800
  %v936 = vunpack.c.l.b16 %v801
  %v937 = vunpack.c.l.b16 %v802
  %v938 = vunpack.c.l.b16 %v803
  %v939 = vunpack.c.l.b16 %v804
  %v940 = vunpack.c.l.b16 %v805
  %v941 = vunpack.c.l.b16 %v806
  %v942 = vunpack.c.l.b16 %v807
  %v943 = vunpack.c.l.b16 %v808
  %v944 = vunpack.c.l.b16 %v809
  %v945 = vunpack.c.l.b16 %v810
  %v946 = vunpack.c.l.b16 %v811
  %v947 = vunpack.c.l.b16 %v812
  %v948 = vunpack.c.l.b16 %v813
  %v949 = vunpack.c.l.b16 %v814
  %v950 = vunpack.c.l.b16 %v815
  %v951 = vunpack.c.l.b16 %v816
  %v952 = vunpack.c.l.b16 %v817
  %v953 = vunpack.c.l.b16 %v818
  %v954 = vunpack.c.l.b16 %v819
  %v955 = vunpack.c.l.b16 %v820
  %v956 = vunpack.c.l.b16 %v821
  %v957 = vunpack.c.l.b16 %v822
  %v958 = vunpack.c.l.b16 %v823
  %v959 = vunpack.c.l.b16 %v824
  %v960 = vpack.c.b16 %v897, %v896
  %v961 = vpack.c.b16 %v899, %v898
  %v962 = vpack.c.b16 %v901, %v900
  %v963 = vpack.c.b16 %v903, %v902
  %v964 = vpack.c.b16 %v905, %v904
  %v965 = vpack.c.b16 %v907, %v906
  %v966 = vpack.c.b16 %v909, %v908
  %v967 = vpack.c.b16 %v911, %v910
  %v968 = vpack.c.b16 %v913, %v912
  %v969 = vpack.c.b16 %v915, %v914
  %v970 = vpack.c.b16 %v917, %v916
  %v971 = vpack.c.b16 %v919, %v918
  %v972 = vpack.c.b16 %v921, %v920
  %v973 = vpack.c.b16 %v923, %v922
  %v974 = vpack.c.b16 %v925, %v924
  %v975 = vpack.c.b16 %v927, %v926
  %v976 = vpack.c.b16 %v929, %v928
  %v977 = vpack.c.b16 %v931, %v930
  %v978 = vpack.c.b16 %v933, %v932
  %v979 = vpack.c.b16 %v935, %v934
  %v980 = vpack.c.b16 %v937, %v936
  %v981 = vpack.c.b16 %v939, %v938
  %v982 = vpack.c.b16 %v941, %v940
  %v983 = vpack.c.b16 %v943, %v942
  %v984 = vpack.c.b16 %v945, %v944
  %v985 = vpack.c.b16 %v947, %v946
  %v986 = vpack.c.b16 %v949, %v948
  %v987 = vpack.c.b16 %v951, %v950
  %v988 = vpack.c.b16 %v953, %v952
  %v989 = vpack.c.b16 %v955, %v954
  %v990 = vpack.c.b16 %v957, %v956
  %v991 = vpack.c.b16 %v959, %v958
  %1024 = vmatprep.subr.bf16.mxu0 0
  %1025 = vmatpush1.bf16.msra.mxu0 %v960
  %1026 = vmatprep.subr.bf16.mxu0 0
  %1027 = vmatpush1.bf16.msra.mxu0 %v961
  %1028 = vmatprep.subr.bf16.mxu0 0
  %1029 = vmatpush1.bf16.msra.mxu0 %v962
  %1030 = vmatprep.subr.bf16.mxu0 0
  %1031 = vmatpush1.bf16.msra.mxu0 %v963
  %1032 = vmatprep.subr.bf16.mxu0 0
  %1033 = vmatpush1.bf16.msra.mxu0 %v964
  %1034 = vmatprep.subr.bf16.mxu0 0
  %1035 = vmatpush1.bf16.msra.mxu0 %v965
  %1036 = vmatprep.subr.bf16.mxu0 0
  %1037 = vmatpush1.bf16.msra.mxu0 %v966
  %1038 = vmatprep.subr.bf16.mxu0 0
  %1039 = vmatpush1.bf16.msra.mxu0 %v967
  %1040 = vmatprep.subr.bf16.mxu0 0
  %1041 = vmatpush1.bf16.msra.mxu0 %v968
  %1042 = vmatprep.subr.bf16.mxu0 0
  %1043 = vmatpush1.bf16.msra.mxu0 %v969
  %1044 = vmatprep.subr.bf16.mxu0 0
  %1045 = vmatpush1.bf16.msra.mxu0 %v970
  %1046 = vmatprep.subr.bf16.mxu0 0
  %1047 = vmatpush1.bf16.msra.mxu0 %v971
  %1048 = vmatprep.subr.bf16.mxu0 0
  %1049 = vmatpush1.bf16.msra.mxu0 %v972
  %1050 = vmatprep.subr.bf16.mxu0 0
  %1051 = vmatpush1.bf16.msra.mxu0 %v973
  %1052 = vmatprep.subr.bf16.mxu0 0
  %1053 = vmatpush1.bf16.msra.mxu0 %v974
  %1054 = vmatprep.subr.bf16.mxu0 0
  %1055 = vmatpush1.bf16.msra.mxu0 %v975
  %1056 = vmatprep.mubr.bf16.mxu0 %v745
  %1057 = vmatmul.mubr.bf16.gmra.mrb[0].mxu0 %v744
  %v1058 = vpop.f32.mrb[0].mxu0
  %v1059 = vadd.f32 %v830, %v1058
  %v1060 = vpop.f32.mrb[0].mxu0
  %v1061 = vpop.f32.mrb[0].mxu0
  %v1062 = vadd.f32 %v830, %v1061
  %v1063 = vpop.f32.mrb[0].mxu0
  %1064 = vmatprep.mubr.bf16.mxu0 %v747
  %1065 = vmatmul.mubr.bf16.gmra.mrb[0].mxu0 %v746
  %v1066 = vpop.f32.mrb[0].mxu0
  %v1067 = vadd.f32 %v830, %v1066
  %v1068 = vpop.f32.mrb[0].mxu0
  %v1069 = vpop.f32.mrb[0].mxu0
  %v1070 = vadd.f32 %v830, %v1069
  %v1071 = vpop.f32.mrb[0].mxu0
  %1072 = vmatprep.mubr.bf16.mxu0 %v749
  %1073 = vmatmul.mubr.bf16.gmra.mrb[0].mxu0 %v748
  %v1074 = vpop.f32.mrb[0].mxu0
  %v1075 = vadd.f32 %v830, %v1074
  %v1076 = vpop.f32.mrb[0].mxu0
  %v1077 = vpop.f32.mrb[0].mxu0
  %v1078 = vadd.f32 %v830, %v1077
  %v1079 = vpop.f32.mrb[0].mxu0
  %1080 = vmatprep.mubr.bf16.mxu0 %v751
  %1081 = vmatmul.mubr.bf16.gmra.mrb[0].mxu0 %v750
  %v1082 = vpop.f32.mrb[0].mxu0
  %v1083 = vadd.f32 %v830, %v1082
  %v1084 = vpop.f32.mrb[0].mxu0
  %v1085 = vpop.f32.mrb[0].mxu0
  %v1086 = vadd.f32 %v830, %v1085
  %v1087 = vpop.f32.mrb[0].mxu0
  %1088 = vmatprep.mubr.bf16.mxu0 %v753
  %1089 = vmatmul.mubr.bf16.gmra.mrb[0].mxu0 %v752
  %v1090 = vpop.f32.mrb[0].mxu0
  %v1091 = vadd.f32 %v830, %v1090
  %v1092 = vpop.f32.mrb[0].mxu0
  %v1093 = vpop.f32.mrb[0].mxu0
  %v1094 = vadd.f32 %v830, %v1093
  %v1095 = vpop.f32.mrb[0].mxu0
  %1096 = vmatprep.mubr.bf16.mxu0 %v755
  %1097 = vmatmul.mubr.bf16.gmra.mrb[0].mxu0 %v754
  %v1098 = vpop.f32.mrb[0].mxu0
  %v1099 = vadd.f32 %v830, %v1098
  %v1100 = vpop.f32.mrb[0].mxu0
  %v1101 = vpop.f32.mrb[0].mxu0
  %v1102 = vadd.f32 %v830, %v1101
  %v1103 = vpop.f32.mrb[0].mxu0
  %1104 = vmatprep.mubr.bf16.mxu0 %v757
  %1105 = vmatmul.mubr.bf16.gmra.mrb[0].mxu0 %v756
  %v1106 = vpop.f32.mrb[0].mxu0
  %v1107 = vadd.f32 %v830, %v1106
  %v1108 = vpop.f32.mrb[0].mxu0
  %v1109 = vpop.f32.mrb[0].mxu0
  %v1110 = vadd.f32 %v830, %v1109
  %v1111 = vpop.f32.mrb[0].mxu0
  %1112 = vmatprep.mubr.bf16.mxu0 %v759
  %1113 = vmatmul.mubr.bf16.gmra.mrb[0].mxu0 %v758
  %v1114 = vpop.f32.mrb[0].mxu0
  %v1115 = vadd.f32 %v830, %v1114
  %v1116 = vpop.f32.mrb[0].mxu0
  %v1117 = vpop.f32.mrb[0].mxu0
  %v1118 = vadd.f32 %v830, %v1117
  %v1119 = vpop.f32.mrb[0].mxu0
  %1120 = vdwg.mxu0
  %1121 = vmatprep.subr.bf16.mxu0 0
  %1122 = vmatpush1.bf16.msra.mxu0 %v976
  %1123 = vmatprep.subr.bf16.mxu0 0
  %1124 = vmatpush1.bf16.msra.mxu0 %v977
  %1125 = vmatprep.subr.bf16.mxu0 0
  %1126 = vmatpush1.bf16.msra.mxu0 %v978
  %1127 = vmatprep.subr.bf16.mxu0 0
  %1128 = vmatpush1.bf16.msra.mxu0 %v979
  %1129 = vmatprep.subr.bf16.mxu0 0
  %1130 = vmatpush1.bf16.msra.mxu0 %v980
  %1131 = vmatprep.subr.bf16.mxu0 0
  %1132 = vmatpush1.bf16.msra.mxu0 %v981
  %1133 = vmatprep.subr.bf16.mxu0 0
  %1134 = vmatpush1.bf16.msra.mxu0 %v982
  %1135 = vmatprep.subr.bf16.mxu0 0
  %1136 = vmatpush1.bf16.msra.mxu0 %v983
  %1137 = vmatprep.subr.bf16.mxu0 0
  %1138 = vmatpush1.bf16.msra.mxu0 %v984
  %1139 = vmatprep.subr.bf16.mxu0 0
  %1140 = vmatpush1.bf16.msra.mxu0 %v985
  %1141 = vmatprep.subr.bf16.mxu0 0
  %1142 = vmatpush1.bf16.msra.mxu0 %v986
  %1143 = vmatprep.subr.bf16.mxu0 0
  %1144 = vmatpush1.bf16.msra.mxu0 %v987
  %1145 = vmatprep.subr.bf16.mxu0 0
  %1146 = vmatpush1.bf16.msra.mxu0 %v988
  %1147 = vmatprep.subr.bf16.mxu0 0
  %1148 = vmatpush1.bf16.msra.mxu0 %v989
  %1149 = vmatprep.subr.bf16.mxu0 0
  %1150 = vmatpush1.bf16.msra.mxu0 %v990
  %1151 = vmatprep.subr.bf16.mxu0 0
  %1152 = vmatpush1.bf16.msra.mxu0 %v991
  %1153 = vmatprep.mubr.bf16.mxu0 %v747
  %1154 = vmatmul.mubr.bf16.gmra.mrb[0].mxu0 %v746
  %v1155 = vpop.f32.mrb[0].mxu0
  %v1156 = vadd.f32 %v1059, %v1155
  %v1157 = vpop.f32.mrb[0].mxu0
  %v1158 = vpop.f32.mrb[0].mxu0
  %v1159 = vadd.f32 %v1062, %v1158
  %v1160 = vpop.f32.mrb[0].mxu0
  %1161 = vmatprep.mubr.bf16.mxu0 %v749
  %1162 = vmatmul.mubr.bf16.gmra.mrb[0].mxu0 %v748
  %v1163 = vpop.f32.mrb[0].mxu0
  %v1164 = vadd.f32 %v1067, %v1163
  %v1165 = vpop.f32.mrb[0].mxu0
  %v1166 = vpop.f32.mrb[0].mxu0
  %v1167 = vadd.f32 %v1070, %v1166
  %v1168 = vpop.f32.mrb[0].mxu0
  %1169 = vmatprep.mubr.bf16.mxu0 %v751
  %1170 = vmatmul.mubr.bf16.gmra.mrb[0].mxu0 %v750
  %v1171 = vpop.f32.mrb[0].mxu0
  %v1172 = vadd.f32 %v1075, %v1171
  %v1173 = vpop.f32.mrb[0].mxu0
  %v1174 = vpop.f32.mrb[0].mxu0
  %v1175 = vadd.f32 %v1078, %v1174
  %v1176 = vpop.f32.mrb[0].mxu0
  %1177 = vmatprep.mubr.bf16.mxu0 %v753
  %1178 = vmatmul.mubr.bf16.gmra.mrb[0].mxu0 %v752
  %v1179 = vpop.f32.mrb[0].mxu0
  %v1180 = vadd.f32 %v1083, %v1179
  %v1181 = vpop.f32.mrb[0].mxu0
  %v1182 = vpop.f32.mrb[0].mxu0
  %v1183 = vadd.f32 %v1086, %v1182
  %v1184 = vpop.f32.mrb[0].mxu0
  %1185 = vmatprep.mubr.bf16.mxu0 %v755
  %1186 = vmatmul.mubr.bf16.gmra.mrb[0].mxu0 %v754
  %v1187 = vpop.f32.mrb[0].mxu0
  %v1188 = vadd.f32 %v1091, %v1187
  %v1189 = vpop.f32.mrb[0].mxu0
  %v1190 = vpop.f32.mrb[0].mxu0
  %v1191 = vadd.f32 %v1094, %v1190
  %v1192 = vpop.f32.mrb[0].mxu0
  %1193 = vmatprep.mubr.bf16.mxu0 %v757
  %1194 = vmatmul.mubr.bf16.gmra.mrb[0].mxu0 %v756
  %v1195 = vpop.f32.mrb[0].mxu0
  %v1196 = vadd.f32 %v1099, %v1195
  %v1197 = vpop.f32.mrb[0].mxu0
  %v1198 = vpop.f32.mrb[0].mxu0
  %v1199 = vadd.f32 %v1102, %v1198
  %v1200 = vpop.f32.mrb[0].mxu0
  %1201 = vmatprep.mubr.bf16.mxu0 %v759
  %1202 = vmatmul.mubr.bf16.gmra.mrb[0].mxu0 %v758
  %v1203 = vpop.f32.mrb[0].mxu0
  %v1204 = vadd.f32 %v1107, %v1203
  %v1205 = vpop.f32.mrb[0].mxu0
  %v1206 = vpop.f32.mrb[0].mxu0
  %v1207 = vadd.f32 %v1110, %v1206
  %v1208 = vpop.f32.mrb[0].mxu0
  %1209 = vmatprep.mubr.bf16.mxu0 %v270
  %1210 = vmatmul.mubr.bf16.gmra.mrb[0].mxu0 %v760
  %v1211 = vpop.f32.mrb[0].mxu0
  %v1212 = vadd.f32 %v1115, %v1211
  %v1213 = vpop.f32.mrb[0].mxu0
  %v1214 = vpop.f32.mrb[0].mxu0
  %v1215 = vadd.f32 %v1118, %v1214
  %v1216 = vpop.f32.mrb[0].mxu0
  %1217 = vdwg.mxu0
  %v1218 = vmax.f32 %v1156, 0.0
  %v1219 = vmax.f32 %v1159, 0.0
  %v1220 = vmax.f32 %v1164, 0.0
  %v1221 = vmax.f32 %v1167, 0.0
  %v1222 = vmax.f32 %v1172, 0.0
  %v1223 = vmax.f32 %v1175, 0.0
  %v1224 = vmax.f32 %v1180, 0.0
  %v1225 = vmax.f32 %v1183, 0.0
  %v1226 = vmax.f32 %v1188, 0.0
  %v1227 = vmax.f32 %v1191, 0.0
  %v1228 = vmax.f32 %v1196, 0.0
  %v1229 = vmax.f32 %v1199, 0.0
  %v1230 = vmax.f32 %v1204, 0.0
  %v1231 = vmax.f32 %v1207, 0.0
  %v1232 = vmax.f32 %v1212, 0.0
  %v1233 = vmax.f32 %v1215, 0.0
  %v1234 = vld [vmem:[%s7] sm:$0xf]
  %v1235 = vld [vmem:[%s7 + $0x4] sm:$0xf]
  %v1236 = vld [vmem:[%s7 + $0x8] sm:$0xf]
  %v1237 = vld [vmem:[%s7 + $0xc] sm:$0xf]
  %v1238 = vld [vmem:[%s7 + $0x10] sm:$0xf]
  %v1239 = vld [vmem:[%s7 + $0x14] sm:$0xf]
  %v1240 = vld [vmem:[%s7 + $0x18] sm:$0xf]
  %v1241 = vld [vmem:[%s7 + $0x1c] sm:$0xf]
  %v1242 = vld [vmem:[%s7 + $0x20] sm:$0xf]
  %v1243 = vld [vmem:[%s7 + $0x24] sm:$0xf]
  %v1244 = vld [vmem:[%s7 + $0x28] sm:$0xf]
  %v1245 = vld [vmem:[%s7 + $0x2c] sm:$0xf]
  %v1246 = vld [vmem:[%s7 + $0x30] sm:$0xf]
  %v1247 = vld [vmem:[%s7 + $0x34] sm:$0xf]
  %v1248 = vld [vmem:[%s7 + $0x38] sm:$0xf]
  %v1249 = vld [vmem:[%s7 + $0x3c] sm:$0xf]
  %v1250 = vld [vmem:[%s7 + $0x40] sm:$0xf]
  %v1251 = vld [vmem:[%s7 + $0x44] sm:$0xf]
  %v1252 = vld [vmem:[%s7 + $0x48] sm:$0xf]
  %v1253 = vld [vmem:[%s7 + $0x4c] sm:$0xf]
  %v1254 = vld [vmem:[%s7 + $0x50] sm:$0xf]
  %v1255 = vld [vmem:[%s7 + $0x54] sm:$0xf]
  %v1256 = vld [vmem:[%s7 + $0x58] sm:$0xf]
  %v1257 = vld [vmem:[%s7 + $0x5c] sm:$0xf]
  %v1258 = vld [vmem:[%s7 + $0x60] sm:$0xf]
  %v1259 = vld [vmem:[%s7 + $0x64] sm:$0xf]
  %v1260 = vld [vmem:[%s7 + $0x68] sm:$0xf]
  %v1261 = vld [vmem:[%s7 + $0x6c] sm:$0xf]
  %v1262 = vld [vmem:[%s7 + $0x70] sm:$0xf]
  %v1263 = vld [vmem:[%s7 + $0x74] sm:$0xf]
  %v1264 = vld [vmem:[%s7 + $0x78] sm:$0xf]
  %v1265 = vld [vmem:[%s7 + $0x7c] sm:$0xf]
  %v1266 = vpack.c.bf16 %v1218, 0.0
  %v1267 = vpack.c.bf16 %v1220, %v1219
  %v1268 = vpack.c.bf16 %v1222, %v1221
  %v1269 = vpack.c.bf16 %v1224, %v1223
  %v1270 = vpack.c.bf16 %v1226, %v1225
  %v1271 = vpack.c.bf16 %v1228, %v1227
  %v1272 = vpack.c.bf16 %v1230, %v1229
  %v1273 = vpack.c.bf16 %v1232, %v1231
  %v1274 = vpack.c.bf16 %v1219, %v1218
  %v1275 = vpack.c.bf16 %v1221, %v1220
  %v1276 = vpack.c.bf16 %v1223, %v1222
  %v1277 = vpack.c.bf16 %v1225, %v1224
  %v1278 = vpack.c.bf16 %v1227, %v1226
  %v1279 = vpack.c.bf16 %v1229, %v1228
  %v1280 = vpack.c.bf16 %v1231, %v1230
  %v1281 = vpack.c.bf16 %v1233, %v1232
  %v1290 = vunpack.c.l.b16 %v1242
  %v1291 = vunpack.c.l.b16 %v1243
  %v1292 = vunpack.c.l.b16 %v1244
  %v1293 = vunpack.c.l.b16 %v1245
  %v1294 = vunpack.c.l.b16 %v1246
  %v1295 = vunpack.c.l.b16 %v1247
  %v1296 = vunpack.c.l.b16 %v1248
  %v1297 = vunpack.c.l.b16 %v1249
  %v1298 = vpack.c.b16 %v1291, %v1290
  %v1299 = vpack.c.b16 %v1293, %v1292
  %v1300 = vpack.c.b16 %v1295, %v1294
  %v1301 = vpack.c.b16 %v1297, %v1296
  %vm1306 = vcmask 523264
  %v1308 = vsel %vm1306, %v1274, 0
  %v1311 = vsel %vm1306, %v1275, 0
  %v1314 = vsel %vm1306, %v1276, 0
  %v1317 = vsel %vm1306, %v1277, 0
  %v1320 = vsel %vm1306, %v1278, 0
  %v1323 = vsel %vm1306, %v1279, 0
  %v1326 = vsel %vm1306, %v1280, 0
  %v1329 = vsel %vm1306, %v1281, 0
  %1331 = vmatprep.subr.bf16.mxu0 0
  %1332 = vmatpush1.bf16.msra.mxu0 %v1298
  %1333 = vmatprep.subr.bf16.mxu0 0
  %1334 = vmatpush1.bf16.msra.mxu0 %v1299
  %1335 = vmatprep.subr.bf16.mxu0 0
  %1336 = vmatpush1.bf16.msra.mxu0 %v1300
  %1337 = vmatprep.subr.bf16.mxu0 0
  %1338 = vmatpush1.bf16.msra.mxu0 %v1301
  %1339 = vmatprep.subr.bf16.mxu0 0
  %1340 = vmatpush1.bf16.msra.mxu0 0
  %1341 = vmatprep.subr.bf16.mxu0 0
  %1342 = vmatpush1.bf16.msra.mxu0 0
  %1343 = vmatprep.subr.bf16.mxu0 0
  %1344 = vmatpush1.bf16.msra.mxu0 0
  %1345 = vmatprep.subr.bf16.mxu0 0
  %1346 = vmatpush1.bf16.msra.mxu0 0
  %1347 = vmatprep.subr.bf16.mxu0 0
  %1348 = vmatpush1.bf16.msra.mxu0 0
  %1349 = vmatprep.subr.bf16.mxu0 0
  %1350 = vmatpush1.bf16.msra.mxu0 0
  %1351 = vmatprep.subr.bf16.mxu0 0
  %1352 = vmatpush1.bf16.msra.mxu0 0
  %1353 = vmatprep.subr.bf16.mxu0 0
  %1354 = vmatpush1.bf16.msra.mxu0 0
  %1355 = vmatprep.subr.bf16.mxu0 0
  %1356 = vmatpush1.bf16.msra.mxu0 0
  %1357 = vmatprep.subr.bf16.mxu0 0
  %1358 = vmatpush1.bf16.msra.mxu0 0
  %1359 = vmatprep.subr.bf16.mxu0 0
  %1360 = vmatpush1.bf16.msra.mxu0 0
  %1361 = vmatprep.subr.bf16.mxu0 0
  %1362 = vmatpush1.bf16.msra.mxu0 0
  %1363 = vmatprep.mubr.bf16.mxu0 0
  %1364 = vmatmul.mubr.bf16.gmra.mrb[0].mxu0 %v1308
  %v1365 = vpop.f32.mrb[0].mxu0
  %v1366 = vadd.f32 0.0, %v1365
  %v1367 = vpop.f32.mrb[0].mxu0
  %v1368 = vpop.f32.mrb[0].mxu0
  %v1369 = vadd.f32 0.0, %v1368
  %v1370 = vpop.f32.mrb[0].mxu0
  %1371 = vmatprep.mubr.bf16.mxu0 0
  %1372 = vmatmul.mubr.bf16.gmra.mrb[0].mxu0 %v1311
  %v1373 = vpop.f32.mrb[0].mxu0
  %v1374 = vadd.f32 0.0, %v1373
  %v1375 = vpop.f32.mrb[0].mxu0
  %v1376 = vpop.f32.mrb[0].mxu0
  %v1377 = vadd.f32 0.0, %v1376
  %v1378 = vpop.f32.mrb[0].mxu0
  %1379 = vmatprep.mubr.bf16.mxu0 0
  %1380 = vmatmul.mubr.bf16.gmra.mrb[0].mxu0 %v1314
  %v1381 = vpop.f32.mrb[0].mxu0
  %v1382 = vadd.f32 0.0, %v1381
  %v1383 = vpop.f32.mrb[0].mxu0
  %v1384 = vpop.f32.mrb[0].mxu0
  %v1385 = vadd.f32 0.0, %v1384
  %v1386 = vpop.f32.mrb[0].mxu0
  %1387 = vmatprep.mubr.bf16.mxu0 0
  %1388 = vmatmul.mubr.bf16.gmra.mrb[0].mxu0 %v1317
  %v1389 = vpop.f32.mrb[0].mxu0
  %v1390 = vadd.f32 0.0, %v1389
  %v1391 = vpop.f32.mrb[0].mxu0
  %v1392 = vpop.f32.mrb[0].mxu0
  %v1393 = vadd.f32 0.0, %v1392
  %v1394 = vpop.f32.mrb[0].mxu0
  %1395 = vmatprep.mubr.bf16.mxu0 0
  %1396 = vmatmul.mubr.bf16.gmra.mrb[0].mxu0 %v1320
  %v1397 = vpop.f32.mrb[0].mxu0
  %v1398 = vadd.f32 0.0, %v1397
  %v1399 = vpop.f32.mrb[0].mxu0
  %v1400 = vpop.f32.mrb[0].mxu0
  %v1401 = vadd.f32 0.0, %v1400
  %v1402 = vpop.f32.mrb[0].mxu0
  %1403 = vmatprep.mubr.bf16.mxu0 0
  %1404 = vmatmul.mubr.bf16.gmra.mrb[0].mxu0 %v1323
  %v1405 = vpop.f32.mrb[0].mxu0
  %v1406 = vadd.f32 0.0, %v1405
  %v1407 = vpop.f32.mrb[0].mxu0
  %v1408 = vpop.f32.mrb[0].mxu0
  %v1409 = vadd.f32 0.0, %v1408
  %v1410 = vpop.f32.mrb[0].mxu0
  %1411 = vmatprep.mubr.bf16.mxu0 0
  %1412 = vmatmul.mubr.bf16.gmra.mrb[0].mxu0 %v1326
  %v1413 = vpop.f32.mrb[0].mxu0
  %v1414 = vadd.f32 0.0, %v1413
  %v1415 = vpop.f32.mrb[0].mxu0
  %v1416 = vpop.f32.mrb[0].mxu0
  %v1417 = vadd.f32 0.0, %v1416
  %v1418 = vpop.f32.mrb[0].mxu0
  %1419 = vmatprep.mubr.bf16.mxu0 0
  %1420 = vmatmul.mubr.bf16.gmra.mrb[0].mxu0 %v1329
  %v1421 = vpop.f32.mrb[0].mxu0
  %v1422 = vadd.f32 0.0, %v1421
  %v1423 = vpop.f32.mrb[0].mxu0
  %v1424 = vpop.f32.mrb[0].mxu0
  %v1425 = vadd.f32 0.0, %v1424
  %v1426 = vpop.f32.mrb[0].mxu0
  %1427 = vdwg.mxu0
  %v1436 = vunpack.c.l.b16 %v1234
  %v1437 = vunpack.c.l.b16 %v1235
  %v1438 = vunpack.c.l.b16 %v1236
  %v1439 = vunpack.c.l.b16 %v1237
  %v1440 = vunpack.c.l.b16 %v1238
  %v1441 = vunpack.c.l.b16 %v1239
  %v1442 = vunpack.c.l.b16 %v1240
  %v1443 = vunpack.c.l.b16 %v1241
  %v1444 = vpack.c.b16 %v1437, %v1436
  %v1445 = vpack.c.b16 %v1439, %v1438
  %v1446 = vpack.c.b16 %v1441, %v1440
  %v1447 = vpack.c.b16 %v1443, %v1442
  %v1453 = vsel %vm1306, %v1266, 0
  %v1456 = vsel %vm1306, %v1267, 0
  %v1459 = vsel %vm1306, %v1268, 0
  %v1462 = vsel %vm1306, %v1269, 0
  %v1465 = vsel %vm1306, %v1270, 0
  %v1468 = vsel %vm1306, %v1271, 0
  %v1471 = vsel %vm1306, %v1272, 0
  %v1474 = vsel %vm1306, %v1273, 0
  %1476 = vmatprep.subr.bf16.mxu0 0
  %1477 = vmatpush1.bf16.msra.mxu0 %v1444
  %1478 = vmatprep.subr.bf16.mxu0 0
  %1479 = vmatpush1.bf16.msra.mxu0 %v1445
  %1480 = vmatprep.subr.bf16.mxu0 0
  %1481 = vmatpush1.bf16.msra.mxu0 %v1446
  %1482 = vmatprep.subr.bf16.mxu0 0
  %1483 = vmatpush1.bf16.msra.mxu0 %v1447
  %1484 = vmatprep.subr.bf16.mxu0 0
  %1485 = vmatpush1.bf16.msra.mxu0 0
  %1486 = vmatprep.subr.bf16.mxu0 0
  %1487 = vmatpush1.bf16.msra.mxu0 0
  %1488 = vmatprep.subr.bf16.mxu0 0
  %1489 = vmatpush1.bf16.msra.mxu0 0
  %1490 = vmatprep.subr.bf16.mxu0 0
  %1491 = vmatpush1.bf16.msra.mxu0 0
  %1492 = vmatprep.subr.bf16.mxu0 0
  %1493 = vmatpush1.bf16.msra.mxu0 0
  %1494 = vmatprep.subr.bf16.mxu0 0
  %1495 = vmatpush1.bf16.msra.mxu0 0
  %1496 = vmatprep.subr.bf16.mxu0 0
  %1497 = vmatpush1.bf16.msra.mxu0 0
  %1498 = vmatprep.subr.bf16.mxu0 0
  %1499 = vmatpush1.bf16.msra.mxu0 0
  %1500 = vmatprep.subr.bf16.mxu0 0
  %1501 = vmatpush1.bf16.msra.mxu0 0
  %1502 = vmatprep.subr.bf16.mxu0 0
  %1503 = vmatpush1.bf16.msra.mxu0 0
  %1504 = vmatprep.subr.bf16.mxu0 0
  %1505 = vmatpush1.bf16.msra.mxu0 0
  %1506 = vmatprep.subr.bf16.mxu0 0
  %1507 = vmatpush1.bf16.msra.mxu0 0
  %1508 = vmatprep.mubr.bf16.mxu0 0
  %1509 = vmatmul.mubr.bf16.gmra.mrb[0].mxu0 %v1453
  %v1510 = vpop.f32.mrb[0].mxu0
  %v1511 = vadd.f32 %v1366, %v1510
  %v1512 = vpop.f32.mrb[0].mxu0
  %v1513 = vpop.f32.mrb[0].mxu0
  %v1514 = vadd.f32 %v1369, %v1513
  %v1515 = vpop.f32.mrb[0].mxu0
  %1516 = vmatprep.mubr.bf16.mxu0 0
  %1517 = vmatmul.mubr.bf16.gmra.mrb[0].mxu0 %v1456
  %v1518 = vpop.f32.mrb[0].mxu0
  %v1519 = vadd.f32 %v1374, %v1518
  %v1520 = vpop.f32.mrb[0].mxu0
  %v1521 = vpop.f32.mrb[0].mxu0
  %v1522 = vadd.f32 %v1377, %v1521
  %v1523 = vpop.f32.mrb[0].mxu0
  %1524 = vmatprep.mubr.bf16.mxu0 0
  %1525 = vmatmul.mubr.bf16.gmra.mrb[0].mxu0 %v1459
  %v1526 = vpop.f32.mrb[0].mxu0
  %v1527 = vadd.f32 %v1382, %v1526
  %v1528 = vpop.f32.mrb[0].mxu0
  %v1529 = vpop.f32.mrb[0].mxu0
  %v1530 = vadd.f32 %v1385, %v1529
  %v1531 = vpop.f32.mrb[0].mxu0
  %1532 = vmatprep.mubr.bf16.mxu0 0
  %1533 = vmatmul.mubr.bf16.gmra.mrb[0].mxu0 %v1462
  %v1534 = vpop.f32.mrb[0].mxu0
  %v1535 = vadd.f32 %v1390, %v1534
  %v1536 = vpop.f32.mrb[0].mxu0
  %v1537 = vpop.f32.mrb[0].mxu0
  %v1538 = vadd.f32 %v1393, %v1537
  %v1539 = vpop.f32.mrb[0].mxu0
  %1540 = vmatprep.mubr.bf16.mxu0 0
  %1541 = vmatmul.mubr.bf16.gmra.mrb[0].mxu0 %v1465
  %v1542 = vpop.f32.mrb[0].mxu0
  %v1543 = vadd.f32 %v1398, %v1542
  %v1544 = vpop.f32.mrb[0].mxu0
  %v1545 = vpop.f32.mrb[0].mxu0
  %v1546 = vadd.f32 %v1401, %v1545
  %v1547 = vpop.f32.mrb[0].mxu0
  %1548 = vmatprep.mubr.bf16.mxu0 0
  %1549 = vmatmul.mubr.bf16.gmra.mrb[0].mxu0 %v1468
  %v1550 = vpop.f32.mrb[0].mxu0
  %v1551 = vadd.f32 %v1406, %v1550
  %v1552 = vpop.f32.mrb[0].mxu0
  %v1553 = vpop.f32.mrb[0].mxu0
  %v1554 = vadd.f32 %v1409, %v1553
  %v1555 = vpop.f32.mrb[0].mxu0
  %1556 = vmatprep.mubr.bf16.mxu0 0
  %1557 = vmatmul.mubr.bf16.gmra.mrb[0].mxu0 %v1471
  %v1558 = vpop.f32.mrb[0].mxu0
  %v1559 = vadd.f32 %v1414, %v1558
  %v1560 = vpop.f32.mrb[0].mxu0
  %v1561 = vpop.f32.mrb[0].mxu0
  %v1562 = vadd.f32 %v1417, %v1561
  %v1563 = vpop.f32.mrb[0].mxu0
  %1564 = vmatprep.mubr.bf16.mxu0 0
  %1565 = vmatmul.mubr.bf16.gmra.mrb[0].mxu0 %v1474
  %v1566 = vpop.f32.mrb[0].mxu0
  %v1567 = vadd.f32 %v1422, %v1566
  %v1568 = vpop.f32.mrb[0].mxu0
  %v1569 = vpop.f32.mrb[0].mxu0
  %v1570 = vadd.f32 %v1425, %v1569
  %v1571 = vpop.f32.mrb[0].mxu0
  %1572 = vdwg.mxu0
  %v1573 = vpack.c.bf16 0.0, %v1233
  %v1582 = vunpack.c.l.b16 %v1250
  %v1583 = vunpack.c.l.b16 %v1251
  %v1584 = vunpack.c.l.b16 %v1252
  %v1585 = vunpack.c.l.b16 %v1253
  %v1586 = vunpack.c.l.b16 %v1254
  %v1587 = vunpack.c.l.b16 %v1255
  %v1588 = vunpack.c.l.b16 %v1256
  %v1589 = vunpack.c.l.b16 %v1257
  %v1590 = vpack.c.b16 %v1583, %v1582
  %v1591 = vpack.c.b16 %v1585, %v1584
  %v1592 = vpack.c.b16 %v1587, %v1586
  %v1593 = vpack.c.b16 %v1589, %v1588
  %v1599 = vsel %vm1306, %v1573, 0
  %1601 = vmatprep.subr.bf16.mxu0 0
  %1602 = vmatpush1.bf16.msra.mxu0 %v1590
  %1603 = vmatprep.subr.bf16.mxu0 0
  %1604 = vmatpush1.bf16.msra.mxu0 %v1591
  %1605 = vmatprep.subr.bf16.mxu0 0
  %1606 = vmatpush1.bf16.msra.mxu0 %v1592
  %1607 = vmatprep.subr.bf16.mxu0 0
  %1608 = vmatpush1.bf16.msra.mxu0 %v1593
  %1609 = vmatprep.subr.bf16.mxu0 0
  %1610 = vmatpush1.bf16.msra.mxu0 0
  %1611 = vmatprep.subr.bf16.mxu0 0
  %1612 = vmatpush1.bf16.msra.mxu0 0
  %1613 = vmatprep.subr.bf16.mxu0 0
  %1614 = vmatpush1.bf16.msra.mxu0 0
  %1615 = vmatprep.subr.bf16.mxu0 0
  %1616 = vmatpush1.bf16.msra.mxu0 0
  %1617 = vmatprep.subr.bf16.mxu0 0
  %1618 = vmatpush1.bf16.msra.mxu0 0
  %1619 = vmatprep.subr.bf16.mxu0 0
  %1620 = vmatpush1.bf16.msra.mxu0 0
  %1621 = vmatprep.subr.bf16.mxu0 0
  %1622 = vmatpush1.bf16.msra.mxu0 0
  %1623 = vmatprep.subr.bf16.mxu0 0
  %1624 = vmatpush1.bf16.msra.mxu0 0
  %1625 = vmatprep.subr.bf16.mxu0 0
  %1626 = vmatpush1.bf16.msra.mxu0 0
  %1627 = vmatprep.subr.bf16.mxu0 0
  %1628 = vmatpush1.bf16.msra.mxu0 0
  %1629 = vmatprep.subr.bf16.mxu0 0
  %1630 = vmatpush1.bf16.msra.mxu0 0
  %1631 = vmatprep.subr.bf16.mxu0 0
  %1632 = vmatpush1.bf16.msra.mxu0 0
  %1633 = vmatprep.mubr.bf16.mxu0 0
  %1634 = vmatmul.mubr.bf16.gmra.mrb[0].mxu0 %v1456
  %v1635 = vpop.f32.mrb[0].mxu0
  %v1636 = vadd.f32 0.0, %v1635
  %v1637 = vpop.f32.mrb[0].mxu0
  %v1638 = vpop.f32.mrb[0].mxu0
  %v1639 = vadd.f32 0.0, %v1638
  %v1640 = vpop.f32.mrb[0].mxu0
  %1641 = vmatprep.mubr.bf16.mxu0 0
  %1642 = vmatmul.mubr.bf16.gmra.mrb[0].mxu0 %v1459
  %v1643 = vpop.f32.mrb[0].mxu0
  %v1644 = vadd.f32 0.0, %v1643
  %v1645 = vpop.f32.mrb[0].mxu0
  %v1646 = vpop.f32.mrb[0].mxu0
  %v1647 = vadd.f32 0.0, %v1646
  %v1648 = vpop.f32.mrb[0].mxu0
  %1649 = vmatprep.mubr.bf16.mxu0 0
  %1650 = vmatmul.mubr.bf16.gmra.mrb[0].mxu0 %v1462
  %v1651 = vpop.f32.mrb[0].mxu0
  %v1652 = vadd.f32 0.0, %v1651
  %v1653 = vpop.f32.mrb[0].mxu0
  %v1654 = vpop.f32.mrb[0].mxu0
  %v1655 = vadd.f32 0.0, %v1654
  %v1656 = vpop.f32.mrb[0].mxu0
  %1657 = vmatprep.mubr.bf16.mxu0 0
  %1658 = vmatmul.mubr.bf16.gmra.mrb[0].mxu0 %v1465
  %v1659 = vpop.f32.mrb[0].mxu0
  %v1660 = vadd.f32 0.0, %v1659
  %v1661 = vpop.f32.mrb[0].mxu0
  %v1662 = vpop.f32.mrb[0].mxu0
  %v1663 = vadd.f32 0.0, %v1662
  %v1664 = vpop.f32.mrb[0].mxu0
  %1665 = vmatprep.mubr.bf16.mxu0 0
  %1666 = vmatmul.mubr.bf16.gmra.mrb[0].mxu0 %v1468
  %v1667 = vpop.f32.mrb[0].mxu0
  %v1668 = vadd.f32 0.0, %v1667
  %v1669 = vpop.f32.mrb[0].mxu0
  %v1670 = vpop.f32.mrb[0].mxu0
  %v1671 = vadd.f32 0.0, %v1670
  %v1672 = vpop.f32.mrb[0].mxu0
  %1673 = vmatprep.mubr.bf16.mxu0 0
  %1674 = vmatmul.mubr.bf16.gmra.mrb[0].mxu0 %v1471
  %v1675 = vpop.f32.mrb[0].mxu0
  %v1676 = vadd.f32 0.0, %v1675
  %v1677 = vpop.f32.mrb[0].mxu0
  %v1678 = vpop.f32.mrb[0].mxu0
  %v1679 = vadd.f32 0.0, %v1678
  %v1680 = vpop.f32.mrb[0].mxu0
  %1681 = vmatprep.mubr.bf16.mxu0 0
  %1682 = vmatmul.mubr.bf16.gmra.mrb[0].mxu0 %v1474
  %v1683 = vpop.f32.mrb[0].mxu0
  %v1684 = vadd.f32 0.0, %v1683
  %v1685 = vpop.f32.mrb[0].mxu0
  %v1686 = vpop.f32.mrb[0].mxu0
  %v1687 = vadd.f32 0.0, %v1686
  %v1688 = vpop.f32.mrb[0].mxu0
  %1689 = vmatprep.mubr.bf16.mxu0 0
  %1690 = vmatmul.mubr.bf16.gmra.mrb[0].mxu0 %v1599
  %v1691 = vpop.f32.mrb[0].mxu0
  %v1692 = vadd.f32 0.0, %v1691
  %v1693 = vpop.f32.mrb[0].mxu0
  %v1694 = vpop.f32.mrb[0].mxu0
  %v1695 = vadd.f32 0.0, %v1694
  %v1696 = vpop.f32.mrb[0].mxu0
  %1697 = vdwg.mxu0
  %v1698 = vadd.f32 %v1511, %v1636
  %v1699 = vadd.f32 %v1514, %v1639
  %v1700 = vadd.f32 %v1519, %v1644
  %v1701 = vadd.f32 %v1522, %v1647
  %v1702 = vadd.f32 %v1527, %v1652
  %v1703 = vadd.f32 %v1530, %v1655
  %v1704 = vadd.f32 %v1535, %v1660
  %v1705 = vadd.f32 %v1538, %v1663
  %v1706 = vadd.f32 %v1543, %v1668
  %v1707 = vadd.f32 %v1546, %v1671
  %v1708 = vadd.f32 %v1551, %v1676
  %v1709 = vadd.f32 %v1554, %v1679
  %v1710 = vadd.f32 %v1559, %v1684
  %v1711 = vadd.f32 %v1562, %v1687
  %v1712 = vadd.f32 %v1567, %v1692
  %v1713 = vadd.f32 %v1570, %v1695
  %v1722 = vunpack.c.l.b16 %v1258
  %v1723 = vunpack.c.l.b16 %v1259
  %v1724 = vunpack.c.l.b16 %v1260
  %v1725 = vunpack.c.l.b16 %v1261
  %v1726 = vunpack.c.l.b16 %v1262
  %v1727 = vunpack.c.l.b16 %v1263
  %v1728 = vunpack.c.l.b16 %v1264
  %v1729 = vunpack.c.l.b16 %v1265
  %v1730 = vpack.c.b16 %v1723, %v1722
  %v1731 = vpack.c.b16 %v1725, %v1724
  %v1732 = vpack.c.b16 %v1727, %v1726
  %v1733 = vpack.c.b16 %v1729, %v1728
  %v1739 = vsel %vm1306, %v270, 0
  %1741 = vmatprep.subr.bf16.mxu0 0
  %1742 = vmatpush1.bf16.msra.mxu0 %v1730
  %1743 = vmatprep.subr.bf16.mxu0 0
  %1744 = vmatpush1.bf16.msra.mxu0 %v1731
  %1745 = vmatprep.subr.bf16.mxu0 0
  %1746 = vmatpush1.bf16.msra.mxu0 %v1732
  %1747 = vmatprep.subr.bf16.mxu0 0
  %1748 = vmatpush1.bf16.msra.mxu0 %v1733
  %1749 = vmatprep.subr.bf16.mxu0 0
  %1750 = vmatpush1.bf16.msra.mxu0 0
  %1751 = vmatprep.subr.bf16.mxu0 0
  %1752 = vmatpush1.bf16.msra.mxu0 0
  %1753 = vmatprep.subr.bf16.mxu0 0
  %1754 = vmatpush1.bf16.msra.mxu0 0
  %1755 = vmatprep.subr.bf16.mxu0 0
  %1756 = vmatpush1.bf16.msra.mxu0 0
  %1757 = vmatprep.subr.bf16.mxu0 0
  %1758 = vmatpush1.bf16.msra.mxu0 0
  %1759 = vmatprep.subr.bf16.mxu0 0
  %1760 = vmatpush1.bf16.msra.mxu0 0
  %1761 = vmatprep.subr.bf16.mxu0 0
  %1762 = vmatpush1.bf16.msra.mxu0 0
  %1763 = vmatprep.subr.bf16.mxu0 0
  %1764 = vmatpush1.bf16.msra.mxu0 0
  %1765 = vmatprep.subr.bf16.mxu0 0
  %1766 = vmatpush1.bf16.msra.mxu0 0
  %1767 = vmatprep.subr.bf16.mxu0 0
  %1768 = vmatpush1.bf16.msra.mxu0 0
  %1769 = vmatprep.subr.bf16.mxu0 0
  %1770 = vmatpush1.bf16.msra.mxu0 0
  %1771 = vmatprep.subr.bf16.mxu0 0
  %1772 = vmatpush1.bf16.msra.mxu0 0
  %1773 = vmatprep.mubr.bf16.mxu0 0
  %1774 = vmatmul.mubr.bf16.gmra.mrb[0].mxu0 %v1311
  %v1775 = vpop.f32.mrb[0].mxu0
  %v1776 = vadd.f32 0.0, %v1775
  %v1777 = vpop.f32.mrb[0].mxu0
  %v1778 = vpop.f32.mrb[0].mxu0
  %v1779 = vadd.f32 0.0, %v1778
  %v1780 = vpop.f32.mrb[0].mxu0
  %1781 = vmatprep.mubr.bf16.mxu0 0
  %1782 = vmatmul.mubr.bf16.gmra.mrb[0].mxu0 %v1314
  %v1783 = vpop.f32.mrb[0].mxu0
  %v1784 = vadd.f32 0.0, %v1783
  %v1785 = vpop.f32.mrb[0].mxu0
  %v1786 = vpop.f32.mrb[0].mxu0
  %v1787 = vadd.f32 0.0, %v1786
  %v1788 = vpop.f32.mrb[0].mxu0
  %1789 = vmatprep.mubr.bf16.mxu0 0
  %1790 = vmatmul.mubr.bf16.gmra.mrb[0].mxu0 %v1317
  %v1791 = vpop.f32.mrb[0].mxu0
  %v1792 = vadd.f32 0.0, %v1791
  %v1793 = vpop.f32.mrb[0].mxu0
  %v1794 = vpop.f32.mrb[0].mxu0
  %v1795 = vadd.f32 0.0, %v1794
  %v1796 = vpop.f32.mrb[0].mxu0
  %1797 = vmatprep.mubr.bf16.mxu0 0
  %1798 = vmatmul.mubr.bf16.gmra.mrb[0].mxu0 %v1320
  %v1799 = vpop.f32.mrb[0].mxu0
  %v1800 = vadd.f32 0.0, %v1799
  %v1801 = vpop.f32.mrb[0].mxu0
  %v1802 = vpop.f32.mrb[0].mxu0
  %v1803 = vadd.f32 0.0, %v1802
  %v1804 = vpop.f32.mrb[0].mxu0
  %1805 = vmatprep.mubr.bf16.mxu0 0
  %1806 = vmatmul.mubr.bf16.gmra.mrb[0].mxu0 %v1323
  %v1807 = vpop.f32.mrb[0].mxu0
  %v1808 = vadd.f32 0.0, %v1807
  %v1809 = vpop.f32.mrb[0].mxu0
  %v1810 = vpop.f32.mrb[0].mxu0
  %v1811 = vadd.f32 0.0, %v1810
  %v1812 = vpop.f32.mrb[0].mxu0
  %1813 = vmatprep.mubr.bf16.mxu0 0
  %1814 = vmatmul.mubr.bf16.gmra.mrb[0].mxu0 %v1326
  %v1815 = vpop.f32.mrb[0].mxu0
  %v1816 = vadd.f32 0.0, %v1815
  %v1817 = vpop.f32.mrb[0].mxu0
  %v1818 = vpop.f32.mrb[0].mxu0
  %v1819 = vadd.f32 0.0, %v1818
  %v1820 = vpop.f32.mrb[0].mxu0
  %1821 = vmatprep.mubr.bf16.mxu0 0
  %1822 = vmatmul.mubr.bf16.gmra.mrb[0].mxu0 %v1329
  %v1823 = vpop.f32.mrb[0].mxu0
  %v1824 = vadd.f32 0.0, %v1823
  %v1825 = vpop.f32.mrb[0].mxu0
  %v1826 = vpop.f32.mrb[0].mxu0
  %v1827 = vadd.f32 0.0, %v1826
  %v1828 = vpop.f32.mrb[0].mxu0
  %1829 = vmatprep.mubr.bf16.mxu0 0
  %1830 = vmatmul.mubr.bf16.gmra.mrb[0].mxu0 %v1739
  %v1831 = vpop.f32.mrb[0].mxu0
  %v1832 = vadd.f32 0.0, %v1831
  %v1833 = vpop.f32.mrb[0].mxu0
  %v1834 = vpop.f32.mrb[0].mxu0
  %v1835 = vadd.f32 0.0, %v1834
  %v1836 = vpop.f32.mrb[0].mxu0
  %1837 = vdwg.mxu0
  %v1838 = vadd.f32 %v1698, %v1776
  %v1839 = vadd.f32 %v1699, %v1779
  %v1840 = vadd.f32 %v1700, %v1784
  %v1841 = vadd.f32 %v1701, %v1787
  %v1842 = vadd.f32 %v1702, %v1792
  %v1843 = vadd.f32 %v1703, %v1795
  %v1844 = vadd.f32 %v1704, %v1800
  %v1845 = vadd.f32 %v1705, %v1803
  %v1846 = vadd.f32 %v1706, %v1808
  %v1847 = vadd.f32 %v1707, %v1811
  %v1848 = vadd.f32 %v1708, %v1816
  %v1849 = vadd.f32 %v1709, %v1819
  %v1850 = vadd.f32 %v1710, %v1824
  %v1851 = vadd.f32 %v1711, %v1827
  %v1852 = vadd.f32 %v1712, %v1832
  %v1853 = vadd.f32 %v1713, %v1835
  %v1854 = vld [vmem:[%s8] sm:$0x1]
  %v1856 = vlaneseq
  %v1857 = vshrl.u32 %v1856, 7
  %v1858 = vsub.s32 0, %v1857
  %v1859 = vrot.slane %v1854, %v1858
  %v1861 = vadd.f32 %v1838, %v1859
  %v1862 = vadd.f32 %v1839, %v1859
  %v1863 = vadd.f32 %v1840, %v1859
  %v1864 = vadd.f32 %v1841, %v1859
  %v1865 = vadd.f32 %v1842, %v1859
  %v1866 = vadd.f32 %v1843, %v1859
  %v1867 = vadd.f32 %v1844, %v1859
  %v1868 = vadd.f32 %v1845, %v1859
  %v1869 = vadd.f32 %v1846, %v1859
  %v1870 = vadd.f32 %v1847, %v1859
  %v1871 = vadd.f32 %v1848, %v1859
  %v1872 = vadd.f32 %v1849, %v1859
  %v1873 = vadd.f32 %v1850, %v1859
  %v1874 = vadd.f32 %v1851, %v1859
  %v1875 = vadd.f32 %v1852, %v1859
  %v1876 = vadd.f32 %v1853, %v1859
  %v1877 = vmax.f32 %v1861, 0.0
  %v1878 = vmax.f32 %v1862, 0.0
  %v1879 = vmax.f32 %v1863, 0.0
  %v1880 = vmax.f32 %v1864, 0.0
  %v1881 = vmax.f32 %v1865, 0.0
  %v1882 = vmax.f32 %v1866, 0.0
  %v1883 = vmax.f32 %v1867, 0.0
  %v1884 = vmax.f32 %v1868, 0.0
  %v1885 = vmax.f32 %v1869, 0.0
  %v1886 = vmax.f32 %v1870, 0.0
  %v1887 = vmax.f32 %v1871, 0.0
  %v1888 = vmax.f32 %v1872, 0.0
  %v1889 = vmax.f32 %v1873, 0.0
  %v1890 = vmax.f32 %v1874, 0.0
  %v1891 = vmax.f32 %v1875, 0.0
  %v1892 = vmax.f32 %v1876, 0.0
  %v1893 = vpack.c.bf16 %v1877, %v1877
  %v1894 = vpack.c.bf16 %v1878, %v1878
  %v1895 = vpack.c.bf16 %v1879, %v1879
  %v1896 = vpack.c.bf16 %v1880, %v1880
  %v1897 = vpack.c.bf16 %v1881, %v1881
  %v1898 = vpack.c.bf16 %v1882, %v1882
  %v1899 = vpack.c.bf16 %v1883, %v1883
  %v1900 = vpack.c.bf16 %v1884, %v1884
  %v1901 = vpack.c.bf16 %v1885, %v1885
  %v1902 = vpack.c.bf16 %v1886, %v1886
  %v1903 = vpack.c.bf16 %v1887, %v1887
  %v1904 = vpack.c.bf16 %v1888, %v1888
  %v1905 = vpack.c.bf16 %v1889, %v1889
  %v1906 = vpack.c.bf16 %v1890, %v1890
  %v1907 = vpack.c.bf16 %v1891, %v1891
  %v1908 = vpack.c.bf16 %v1892, %v1892
  %v1909 = vld [vmem:[%s9] sm:$0xf]
  %v1910 = vld [vmem:[%s9 + $0x4] sm:$0xf]
  %v1911 = vld [vmem:[%s9 + $0x8] sm:$0xf]
  %v1912 = vld [vmem:[%s9 + $0xc] sm:$0xf]
  %v1913 = vld [vmem:[%s9 + $0x10] sm:$0xf]
  %v1914 = vld [vmem:[%s9 + $0x14] sm:$0xf]
  %v1915 = vld [vmem:[%s9 + $0x18] sm:$0xf]
  %v1916 = vld [vmem:[%s9 + $0x1c] sm:$0xf]
  %v1917 = vld [vmem:[%s9 + $0x20] sm:$0xf]
  %v1918 = vld [vmem:[%s9 + $0x24] sm:$0xf]
  %v1919 = vld [vmem:[%s9 + $0x28] sm:$0xf]
  %v1920 = vld [vmem:[%s9 + $0x2c] sm:$0xf]
  %v1921 = vld [vmem:[%s9 + $0x30] sm:$0xf]
  %v1922 = vld [vmem:[%s9 + $0x34] sm:$0xf]
  %v1923 = vld [vmem:[%s9 + $0x38] sm:$0xf]
  %v1924 = vld [vmem:[%s9 + $0x3c] sm:$0xf]
  %v1925 = vld [vmem:[%s9 + $0x40] sm:$0xf]
  %v1926 = vld [vmem:[%s9 + $0x44] sm:$0xf]
  %v1927 = vld [vmem:[%s9 + $0x48] sm:$0xf]
  %v1928 = vld [vmem:[%s9 + $0x4c] sm:$0xf]
  %v1929 = vld [vmem:[%s9 + $0x50] sm:$0xf]
  %v1930 = vld [vmem:[%s9 + $0x54] sm:$0xf]
  %v1931 = vld [vmem:[%s9 + $0x58] sm:$0xf]
  %v1932 = vld [vmem:[%s9 + $0x5c] sm:$0xf]
  %v1933 = vld [vmem:[%s9 + $0x60] sm:$0xf]
  %v1934 = vld [vmem:[%s9 + $0x64] sm:$0xf]
  %v1935 = vld [vmem:[%s9 + $0x68] sm:$0xf]
  %v1936 = vld [vmem:[%s9 + $0x6c] sm:$0xf]
  %v1937 = vld [vmem:[%s9 + $0x70] sm:$0xf]
  %v1938 = vld [vmem:[%s9 + $0x74] sm:$0xf]
  %v1939 = vld [vmem:[%s9 + $0x78] sm:$0xf]
  %v1940 = vld [vmem:[%s9 + $0x7c] sm:$0xf]
  %v1941 = vld [vmem:[%s9 + $0x80] sm:$0xf]
  %v1942 = vld [vmem:[%s9 + $0x84] sm:$0xf]
  %v1943 = vld [vmem:[%s9 + $0x88] sm:$0xf]
  %v1944 = vld [vmem:[%s9 + $0x8c] sm:$0xf]
  %v1945 = vld [vmem:[%s9 + $0x90] sm:$0xf]
  %v1946 = vld [vmem:[%s9 + $0x94] sm:$0xf]
  %v1947 = vld [vmem:[%s9 + $0x98] sm:$0xf]
  %v1948 = vld [vmem:[%s9 + $0x9c] sm:$0xf]
  %v1949 = vld [vmem:[%s9 + $0xa0] sm:$0xf]
  %v1950 = vld [vmem:[%s9 + $0xa4] sm:$0xf]
  %v1951 = vld [vmem:[%s9 + $0xa8] sm:$0xf]
  %v1952 = vld [vmem:[%s9 + $0xac] sm:$0xf]
  %v1953 = vld [vmem:[%s9 + $0xb0] sm:$0xf]
  %v1954 = vld [vmem:[%s9 + $0xb4] sm:$0xf]
  %v1955 = vld [vmem:[%s9 + $0xb8] sm:$0xf]
  %v1956 = vld [vmem:[%s9 + $0xbc] sm:$0xf]
  %v1957 = vld [vmem:[%s9 + $0xc0] sm:$0xf]
  %v1958 = vld [vmem:[%s9 + $0xc4] sm:$0xf]
  %v1959 = vld [vmem:[%s9 + $0xc8] sm:$0xf]
  %v1960 = vld [vmem:[%s9 + $0xcc] sm:$0xf]
  %v1961 = vld [vmem:[%s9 + $0xd0] sm:$0xf]
  %v1962 = vld [vmem:[%s9 + $0xd4] sm:$0xf]
  %v1963 = vld [vmem:[%s9 + $0xd8] sm:$0xf]
  %v1964 = vld [vmem:[%s9 + $0xdc] sm:$0xf]
  %v1965 = vld [vmem:[%s9 + $0xe0] sm:$0xf]
  %v1966 = vld [vmem:[%s9 + $0xe4] sm:$0xf]
  %v1967 = vld [vmem:[%s9 + $0xe8] sm:$0xf]
  %v1968 = vld [vmem:[%s9 + $0xec] sm:$0xf]
  %v1969 = vld [vmem:[%s9 + $0xf0] sm:$0xf]
  %v1970 = vld [vmem:[%s9 + $0xf4] sm:$0xf]
  %v1971 = vld [vmem:[%s9 + $0xf8] sm:$0xf]
  %v1972 = vld [vmem:[%s9 + $0xfc] sm:$0xf]
  %v1977 = vunpack.c.l.b16 %v1909
  %v1978 = vunpack.c.l.b16 %v1910
  %v1979 = vunpack.c.l.b16 %v1911
  %v1980 = vunpack.c.l.b16 %v1912
  %v1981 = vpack.c.b16 %v1978, %v1977
  %v1982 = vpack.c.b16 %v1980, %v1979
  %vm1985 = vcmask 261120
  %v1987 = vsel %vm1985, %v1893, 0
  %1989 = vmatprep.subr.bf16.mxu0 0
  %1990 = vmatpush1.bf16.msra.mxu0 %v1981
  %1991 = vmatprep.subr.bf16.mxu0 0
  %1992 = vmatpush1.bf16.msra.mxu0 %v1982
  %1993 = vmatprep.subr.bf16.mxu0 0
  %1994 = vmatpush1.bf16.msra.mxu0 0
  %1995 = vmatprep.subr.bf16.mxu0 0
  %1996 = vmatpush1.bf16.msra.mxu0 0
  %1997 = vmatprep.subr.bf16.mxu0 0
  %1998 = vmatpush1.bf16.msra.mxu0 0
  %1999 = vmatprep.subr.bf16.mxu0 0
  %2000 = vmatpush1.bf16.msra.mxu0 0
  %2001 = vmatprep.subr.bf16.mxu0 0
  %2002 = vmatpush1.bf16.msra.mxu0 0
  %2003 = vmatprep.subr.bf16.mxu0 0
  %2004 = vmatpush1.bf16.msra.mxu0 0
  %2005 = vmatprep.subr.bf16.mxu0 0
  %2006 = vmatpush1.bf16.msra.mxu0 0
  %2007 = vmatprep.subr.bf16.mxu0 0
  %2008 = vmatpush1.bf16.msra.mxu0 0
  %2009 = vmatprep.subr.bf16.mxu0 0
  %2010 = vmatpush1.bf16.msra.mxu0 0
  %2011 = vmatprep.subr.bf16.mxu0 0
  %2012 = vmatpush1.bf16.msra.mxu0 0
  %2013 = vmatprep.subr.bf16.mxu0 0
  %2014 = vmatpush1.bf16.msra.mxu0 0
  %2015 = vmatprep.subr.bf16.mxu0 0
  %2016 = vmatpush1.bf16.msra.mxu0 0
  %2017 = vmatprep.subr.bf16.mxu0 0
  %2018 = vmatpush1.bf16.msra.mxu0 0
  %2019 = vmatprep.subr.bf16.mxu0 0
  %2020 = vmatpush1.bf16.msra.mxu0 0
  %2021 = vmatprep.mubr.bf16.mxu0 0
  %2022 = vmatmul.mubr.bf16.gmra.mrb[0].mxu0 %v1987
  %v2023 = vpop.f32.mrb[0].mxu0
  %v2024 = vadd.f32 0.0, %v2023
  %v2025 = vpop.f32.mrb[0].mxu0
  %v2026 = vpop.f32.mrb[0].mxu0
  %v2027 = vpop.f32.mrb[0].mxu0
  %2028 = vdwg.mxu0
  %v2033 = vunpack.c.l.b16 %v1913
  %v2034 = vunpack.c.l.b16 %v1914
  %v2035 = vunpack.c.l.b16 %v1915
  %v2036 = vunpack.c.l.b16 %v1916
  %v2037 = vpack.c.b16 %v2034, %v2033
  %v2038 = vpack.c.b16 %v2036, %v2035
  %v2042 = vsel %vm1985, %v1894, 0
  %2044 = vmatprep.subr.bf16.mxu0 0
  %2045 = vmatpush1.bf16.msra.mxu0 %v2037
  %2046 = vmatprep.subr.bf16.mxu0 0
  %2047 = vmatpush1.bf16.msra.mxu0 %v2038
  %2048 = vmatprep.subr.bf16.mxu0 0
  %2049 = vmatpush1.bf16.msra.mxu0 0
  %2050 = vmatprep.subr.bf16.mxu0 0
  %2051 = vmatpush1.bf16.msra.mxu0 0
  %2052 = vmatprep.subr.bf16.mxu0 0
  %2053 = vmatpush1.bf16.msra.mxu0 0
  %2054 = vmatprep.subr.bf16.mxu0 0
  %2055 = vmatpush1.bf16.msra.mxu0 0
  %2056 = vmatprep.subr.bf16.mxu0 0
  %2057 = vmatpush1.bf16.msra.mxu0 0
  %2058 = vmatprep.subr.bf16.mxu0 0
  %2059 = vmatpush1.bf16.msra.mxu0 0
  %2060 = vmatprep.subr.bf16.mxu0 0
  %2061 = vmatpush1.bf16.msra.mxu0 0
  %2062 = vmatprep.subr.bf16.mxu0 0
  %2063 = vmatpush1.bf16.msra.mxu0 0
  %2064 = vmatprep.subr.bf16.mxu0 0
  %2065 = vmatpush1.bf16.msra.mxu0 0
  %2066 = vmatprep.subr.bf16.mxu0 0
  %2067 = vmatpush1.bf16.msra.mxu0 0
  %2068 = vmatprep.subr.bf16.mxu0 0
  %2069 = vmatpush1.bf16.msra.mxu0 0
  %2070 = vmatprep.subr.bf16.mxu0 0
  %2071 = vmatpush1.bf16.msra.mxu0 0
  %2072 = vmatprep.subr.bf16.mxu0 0
  %2073 = vmatpush1.bf16.msra.mxu0 0
  %2074 = vmatprep.subr.bf16.mxu0 0
  %2075 = vmatpush1.bf16.msra.mxu0 0
  %2076 = vmatprep.mubr.bf16.mxu0 0
  %2077 = vmatmul.mubr.bf16.gmra.mrb[0].mxu0 %v2042
  %v2078 = vpop.f32.mrb[0].mxu0
  %v2079 = vadd.f32 0.0, %v2078
  %v2080 = vpop.f32.mrb[0].mxu0
  %v2081 = vpop.f32.mrb[0].mxu0
  %v2082 = vpop.f32.mrb[0].mxu0
  %2083 = vdwg.mxu0
  %v2088 = vunpack.c.l.b16 %v1917
  %v2089 = vunpack.c.l.b16 %v1918
  %v2090 = vunpack.c.l.b16 %v1919
  %v2091 = vunpack.c.l.b16 %v1920
  %v2092 = vpack.c.b16 %v2089, %v2088
  %v2093 = vpack.c.b16 %v2091, %v2090
  %v2097 = vsel %vm1985, %v1895, 0
  %2099 = vmatprep.subr.bf16.mxu0 0
  %2100 = vmatpush1.bf16.msra.mxu0 %v2092
  %2101 = vmatprep.subr.bf16.mxu0 0
  %2102 = vmatpush1.bf16.msra.mxu0 %v2093
  %2103 = vmatprep.subr.bf16.mxu0 0
  %2104 = vmatpush1.bf16.msra.mxu0 0
  %2105 = vmatprep.subr.bf16.mxu0 0
  %2106 = vmatpush1.bf16.msra.mxu0 0
  %2107 = vmatprep.subr.bf16.mxu0 0
  %2108 = vmatpush1.bf16.msra.mxu0 0
  %2109 = vmatprep.subr.bf16.mxu0 0
  %2110 = vmatpush1.bf16.msra.mxu0 0
  %2111 = vmatprep.subr.bf16.mxu0 0
  %2112 = vmatpush1.bf16.msra.mxu0 0
  %2113 = vmatprep.subr.bf16.mxu0 0
  %2114 = vmatpush1.bf16.msra.mxu0 0
  %2115 = vmatprep.subr.bf16.mxu0 0
  %2116 = vmatpush1.bf16.msra.mxu0 0
  %2117 = vmatprep.subr.bf16.mxu0 0
  %2118 = vmatpush1.bf16.msra.mxu0 0
  %2119 = vmatprep.subr.bf16.mxu0 0
  %2120 = vmatpush1.bf16.msra.mxu0 0
  %2121 = vmatprep.subr.bf16.mxu0 0
  %2122 = vmatpush1.bf16.msra.mxu0 0
  %2123 = vmatprep.subr.bf16.mxu0 0
  %2124 = vmatpush1.bf16.msra.mxu0 0
  %2125 = vmatprep.subr.bf16.mxu0 0
  %2126 = vmatpush1.bf16.msra.mxu0 0
  %2127 = vmatprep.subr.bf16.mxu0 0
  %2128 = vmatpush1.bf16.msra.mxu0 0
  %2129 = vmatprep.subr.bf16.mxu0 0
  %2130 = vmatpush1.bf16.msra.mxu0 0
  %2131 = vmatprep.mubr.bf16.mxu0 0
  %2132 = vmatmul.mubr.bf16.gmra.mrb[0].mxu0 %v2097
  %v2133 = vpop.f32.mrb[0].mxu0
  %v2134 = vadd.f32 0.0, %v2133
  %v2135 = vpop.f32.mrb[0].mxu0
  %v2136 = vpop.f32.mrb[0].mxu0
  %v2137 = vpop.f32.mrb[0].mxu0
  %2138 = vdwg.mxu0
  %v2143 = vunpack.c.l.b16 %v1921
  %v2144 = vunpack.c.l.b16 %v1922
  %v2145 = vunpack.c.l.b16 %v1923
  %v2146 = vunpack.c.l.b16 %v1924
  %v2147 = vpack.c.b16 %v2144, %v2143
  %v2148 = vpack.c.b16 %v2146, %v2145
  %v2152 = vsel %vm1985, %v1896, 0
  %2154 = vmatprep.subr.bf16.mxu0 0
  %2155 = vmatpush1.bf16.msra.mxu0 %v2147
  %2156 = vmatprep.subr.bf16.mxu0 0
  %2157 = vmatpush1.bf16.msra.mxu0 %v2148
  %2158 = vmatprep.subr.bf16.mxu0 0
  %2159 = vmatpush1.bf16.msra.mxu0 0
  %2160 = vmatprep.subr.bf16.mxu0 0
  %2161 = vmatpush1.bf16.msra.mxu0 0
  %2162 = vmatprep.subr.bf16.mxu0 0
  %2163 = vmatpush1.bf16.msra.mxu0 0
  %2164 = vmatprep.subr.bf16.mxu0 0
  %2165 = vmatpush1.bf16.msra.mxu0 0
  %2166 = vmatprep.subr.bf16.mxu0 0
  %2167 = vmatpush1.bf16.msra.mxu0 0
  %2168 = vmatprep.subr.bf16.mxu0 0
  %2169 = vmatpush1.bf16.msra.mxu0 0
  %2170 = vmatprep.subr.bf16.mxu0 0
  %2171 = vmatpush1.bf16.msra.mxu0 0
  %2172 = vmatprep.subr.bf16.mxu0 0
  %2173 = vmatpush1.bf16.msra.mxu0 0
  %2174 = vmatprep.subr.bf16.mxu0 0
  %2175 = vmatpush1.bf16.msra.mxu0 0
  %2176 = vmatprep.subr.bf16.mxu0 0
  %2177 = vmatpush1.bf16.msra.mxu0 0
  %2178 = vmatprep.subr.bf16.mxu0 0
  %2179 = vmatpush1.bf16.msra.mxu0 0
  %2180 = vmatprep.subr.bf16.mxu0 0
  %2181 = vmatpush1.bf16.msra.mxu0 0
  %2182 = vmatprep.subr.bf16.mxu0 0
  %2183 = vmatpush1.bf16.msra.mxu0 0
  %2184 = vmatprep.subr.bf16.mxu0 0
  %2185 = vmatpush1.bf16.msra.mxu0 0
  %2186 = vmatprep.mubr.bf16.mxu0 0
  %2187 = vmatmul.mubr.bf16.gmra.mrb[0].mxu0 %v2152
  %v2188 = vpop.f32.mrb[0].mxu0
  %v2189 = vadd.f32 0.0, %v2188
  %v2190 = vpop.f32.mrb[0].mxu0
  %v2191 = vpop.f32.mrb[0].mxu0
  %v2192 = vpop.f32.mrb[0].mxu0
  %2193 = vdwg.mxu0
  %v2198 = vunpack.c.l.b16 %v1925
  %v2199 = vunpack.c.l.b16 %v1926
  %v2200 = vunpack.c.l.b16 %v1927
  %v2201 = vunpack.c.l.b16 %v1928
  %v2202 = vpack.c.b16 %v2199, %v2198
  %v2203 = vpack.c.b16 %v2201, %v2200
  %v2207 = vsel %vm1985, %v1897, 0
  %2209 = vmatprep.subr.bf16.mxu0 0
  %2210 = vmatpush1.bf16.msra.mxu0 %v2202
  %2211 = vmatprep.subr.bf16.mxu0 0
  %2212 = vmatpush1.bf16.msra.mxu0 %v2203
  %2213 = vmatprep.subr.bf16.mxu0 0
  %2214 = vmatpush1.bf16.msra.mxu0 0
  %2215 = vmatprep.subr.bf16.mxu0 0
  %2216 = vmatpush1.bf16.msra.mxu0 0
  %2217 = vmatprep.subr.bf16.mxu0 0
  %2218 = vmatpush1.bf16.msra.mxu0 0
  %2219 = vmatprep.subr.bf16.mxu0 0
  %2220 = vmatpush1.bf16.msra.mxu0 0
  %2221 = vmatprep.subr.bf16.mxu0 0
  %2222 = vmatpush1.bf16.msra.mxu0 0
  %2223 = vmatprep.subr.bf16.mxu0 0
  %2224 = vmatpush1.bf16.msra.mxu0 0
  %2225 = vmatprep.subr.bf16.mxu0 0
  %2226 = vmatpush1.bf16.msra.mxu0 0
  %2227 = vmatprep.subr.bf16.mxu0 0
  %2228 = vmatpush1.bf16.msra.mxu0 0
  %2229 = vmatprep.subr.bf16.mxu0 0
  %2230 = vmatpush1.bf16.msra.mxu0 0
  %2231 = vmatprep.subr.bf16.mxu0 0
  %2232 = vmatpush1.bf16.msra.mxu0 0
  %2233 = vmatprep.subr.bf16.mxu0 0
  %2234 = vmatpush1.bf16.msra.mxu0 0
  %2235 = vmatprep.subr.bf16.mxu0 0
  %2236 = vmatpush1.bf16.msra.mxu0 0
  %2237 = vmatprep.subr.bf16.mxu0 0
  %2238 = vmatpush1.bf16.msra.mxu0 0
  %2239 = vmatprep.subr.bf16.mxu0 0
  %2240 = vmatpush1.bf16.msra.mxu0 0
  %2241 = vmatprep.mubr.bf16.mxu0 0
  %2242 = vmatmul.mubr.bf16.gmra.mrb[0].mxu0 %v2207
  %v2243 = vpop.f32.mrb[0].mxu0
  %v2244 = vadd.f32 0.0, %v2243
  %v2245 = vpop.f32.mrb[0].mxu0
  %v2246 = vpop.f32.mrb[0].mxu0
  %v2247 = vpop.f32.mrb[0].mxu0
  %2248 = vdwg.mxu0
  %v2253 = vunpack.c.l.b16 %v1929
  %v2254 = vunpack.c.l.b16 %v1930
  %v2255 = vunpack.c.l.b16 %v1931
  %v2256 = vunpack.c.l.b16 %v1932
  %v2257 = vpack.c.b16 %v2254, %v2253
  %v2258 = vpack.c.b16 %v2256, %v2255
  %v2262 = vsel %vm1985, %v1898, 0
  %2264 = vmatprep.subr.bf16.mxu0 0
  %2265 = vmatpush1.bf16.msra.mxu0 %v2257
  %2266 = vmatprep.subr.bf16.mxu0 0
  %2267 = vmatpush1.bf16.msra.mxu0 %v2258
  %2268 = vmatprep.subr.bf16.mxu0 0
  %2269 = vmatpush1.bf16.msra.mxu0 0
  %2270 = vmatprep.subr.bf16.mxu0 0
  %2271 = vmatpush1.bf16.msra.mxu0 0
  %2272 = vmatprep.subr.bf16.mxu0 0
  %2273 = vmatpush1.bf16.msra.mxu0 0
  %2274 = vmatprep.subr.bf16.mxu0 0
  %2275 = vmatpush1.bf16.msra.mxu0 0
  %2276 = vmatprep.subr.bf16.mxu0 0
  %2277 = vmatpush1.bf16.msra.mxu0 0
  %2278 = vmatprep.subr.bf16.mxu0 0
  %2279 = vmatpush1.bf16.msra.mxu0 0
  %2280 = vmatprep.subr.bf16.mxu0 0
  %2281 = vmatpush1.bf16.msra.mxu0 0
  %2282 = vmatprep.subr.bf16.mxu0 0
  %2283 = vmatpush1.bf16.msra.mxu0 0
  %2284 = vmatprep.subr.bf16.mxu0 0
  %2285 = vmatpush1.bf16.msra.mxu0 0
  %2286 = vmatprep.subr.bf16.mxu0 0
  %2287 = vmatpush1.bf16.msra.mxu0 0
  %2288 = vmatprep.subr.bf16.mxu0 0
  %2289 = vmatpush1.bf16.msra.mxu0 0
  %2290 = vmatprep.subr.bf16.mxu0 0
  %2291 = vmatpush1.bf16.msra.mxu0 0
  %2292 = vmatprep.subr.bf16.mxu0 0
  %2293 = vmatpush1.bf16.msra.mxu0 0
  %2294 = vmatprep.subr.bf16.mxu0 0
  %2295 = vmatpush1.bf16.msra.mxu0 0
  %2296 = vmatprep.mubr.bf16.mxu0 0
  %2297 = vmatmul.mubr.bf16.gmra.mrb[0].mxu0 %v2262
  %v2298 = vpop.f32.mrb[0].mxu0
  %v2299 = vadd.f32 0.0, %v2298
  %v2300 = vpop.f32.mrb[0].mxu0
  %v2301 = vpop.f32.mrb[0].mxu0
  %v2302 = vpop.f32.mrb[0].mxu0
  %2303 = vdwg.mxu0
  %v2308 = vunpack.c.l.b16 %v1933
  %v2309 = vunpack.c.l.b16 %v1934
  %v2310 = vunpack.c.l.b16 %v1935
  %v2311 = vunpack.c.l.b16 %v1936
  %v2312 = vpack.c.b16 %v2309, %v2308
  %v2313 = vpack.c.b16 %v2311, %v2310
  %v2317 = vsel %vm1985, %v1899, 0
  %2319 = vmatprep.subr.bf16.mxu0 0
  %2320 = vmatpush1.bf16.msra.mxu0 %v2312
  %2321 = vmatprep.subr.bf16.mxu0 0
  %2322 = vmatpush1.bf16.msra.mxu0 %v2313
  %2323 = vmatprep.subr.bf16.mxu0 0
  %2324 = vmatpush1.bf16.msra.mxu0 0
  %2325 = vmatprep.subr.bf16.mxu0 0
  %2326 = vmatpush1.bf16.msra.mxu0 0
  %2327 = vmatprep.subr.bf16.mxu0 0
  %2328 = vmatpush1.bf16.msra.mxu0 0
  %2329 = vmatprep.subr.bf16.mxu0 0
  %2330 = vmatpush1.bf16.msra.mxu0 0
  %2331 = vmatprep.subr.bf16.mxu0 0
  %2332 = vmatpush1.bf16.msra.mxu0 0
  %2333 = vmatprep.subr.bf16.mxu0 0
  %2334 = vmatpush1.bf16.msra.mxu0 0
  %2335 = vmatprep.subr.bf16.mxu0 0
  %2336 = vmatpush1.bf16.msra.mxu0 0
  %2337 = vmatprep.subr.bf16.mxu0 0
  %2338 = vmatpush1.bf16.msra.mxu0 0
  %2339 = vmatprep.subr.bf16.mxu0 0
  %2340 = vmatpush1.bf16.msra.mxu0 0
  %2341 = vmatprep.subr.bf16.mxu0 0
  %2342 = vmatpush1.bf16.msra.mxu0 0
  %2343 = vmatprep.subr.bf16.mxu0 0
  %2344 = vmatpush1.bf16.msra.mxu0 0
  %2345 = vmatprep.subr.bf16.mxu0 0
  %2346 = vmatpush1.bf16.msra.mxu0 0
  %2347 = vmatprep.subr.bf16.mxu0 0
  %2348 = vmatpush1.bf16.msra.mxu0 0
  %2349 = vmatprep.subr.bf16.mxu0 0
  %2350 = vmatpush1.bf16.msra.mxu0 0
  %2351 = vmatprep.mubr.bf16.mxu0 0
  %2352 = vmatmul.mubr.bf16.gmra.mrb[0].mxu0 %v2317
  %v2353 = vpop.f32.mrb[0].mxu0
  %v2354 = vadd.f32 0.0, %v2353
  %v2355 = vpop.f32.mrb[0].mxu0
  %v2356 = vpop.f32.mrb[0].mxu0
  %v2357 = vpop.f32.mrb[0].mxu0
  %2358 = vdwg.mxu0
  %v2363 = vunpack.c.l.b16 %v1937
  %v2364 = vunpack.c.l.b16 %v1938
  %v2365 = vunpack.c.l.b16 %v1939
  %v2366 = vunpack.c.l.b16 %v1940
  %v2367 = vpack.c.b16 %v2364, %v2363
  %v2368 = vpack.c.b16 %v2366, %v2365
  %v2372 = vsel %vm1985, %v1900, 0
  %2374 = vmatprep.subr.bf16.mxu0 0
  %2375 = vmatpush1.bf16.msra.mxu0 %v2367
  %2376 = vmatprep.subr.bf16.mxu0 0
  %2377 = vmatpush1.bf16.msra.mxu0 %v2368
  %2378 = vmatprep.subr.bf16.mxu0 0
  %2379 = vmatpush1.bf16.msra.mxu0 0
  %2380 = vmatprep.subr.bf16.mxu0 0
  %2381 = vmatpush1.bf16.msra.mxu0 0
  %2382 = vmatprep.subr.bf16.mxu0 0
  %2383 = vmatpush1.bf16.msra.mxu0 0
  %2384 = vmatprep.subr.bf16.mxu0 0
  %2385 = vmatpush1.bf16.msra.mxu0 0
  %2386 = vmatprep.subr.bf16.mxu0 0
  %2387 = vmatpush1.bf16.msra.mxu0 0
  %2388 = vmatprep.subr.bf16.mxu0 0
  %2389 = vmatpush1.bf16.msra.mxu0 0
  %2390 = vmatprep.subr.bf16.mxu0 0
  %2391 = vmatpush1.bf16.msra.mxu0 0
  %2392 = vmatprep.subr.bf16.mxu0 0
  %2393 = vmatpush1.bf16.msra.mxu0 0
  %2394 = vmatprep.subr.bf16.mxu0 0
  %2395 = vmatpush1.bf16.msra.mxu0 0
  %2396 = vmatprep.subr.bf16.mxu0 0
  %2397 = vmatpush1.bf16.msra.mxu0 0
  %2398 = vmatprep.subr.bf16.mxu0 0
  %2399 = vmatpush1.bf16.msra.mxu0 0
  %2400 = vmatprep.subr.bf16.mxu0 0
  %2401 = vmatpush1.bf16.msra.mxu0 0
  %2402 = vmatprep.subr.bf16.mxu0 0
  %2403 = vmatpush1.bf16.msra.mxu0 0
  %2404 = vmatprep.subr.bf16.mxu0 0
  %2405 = vmatpush1.bf16.msra.mxu0 0
  %2406 = vmatprep.mubr.bf16.mxu0 0
  %2407 = vmatmul.mubr.bf16.gmra.mrb[0].mxu0 %v2372
  %v2408 = vpop.f32.mrb[0].mxu0
  %v2409 = vadd.f32 0.0, %v2408
  %v2410 = vpop.f32.mrb[0].mxu0
  %v2411 = vpop.f32.mrb[0].mxu0
  %v2412 = vpop.f32.mrb[0].mxu0
  %2413 = vdwg.mxu0
  %v2418 = vunpack.c.l.b16 %v1941
  %v2419 = vunpack.c.l.b16 %v1942
  %v2420 = vunpack.c.l.b16 %v1943
  %v2421 = vunpack.c.l.b16 %v1944
  %v2422 = vpack.c.b16 %v2419, %v2418
  %v2423 = vpack.c.b16 %v2421, %v2420
  %v2427 = vsel %vm1985, %v1901, 0
  %2429 = vmatprep.subr.bf16.mxu0 0
  %2430 = vmatpush1.bf16.msra.mxu0 %v2422
  %2431 = vmatprep.subr.bf16.mxu0 0
  %2432 = vmatpush1.bf16.msra.mxu0 %v2423
  %2433 = vmatprep.subr.bf16.mxu0 0
  %2434 = vmatpush1.bf16.msra.mxu0 0
  %2435 = vmatprep.subr.bf16.mxu0 0
  %2436 = vmatpush1.bf16.msra.mxu0 0
  %2437 = vmatprep.subr.bf16.mxu0 0
  %2438 = vmatpush1.bf16.msra.mxu0 0
  %2439 = vmatprep.subr.bf16.mxu0 0
  %2440 = vmatpush1.bf16.msra.mxu0 0
  %2441 = vmatprep.subr.bf16.mxu0 0
  %2442 = vmatpush1.bf16.msra.mxu0 0
  %2443 = vmatprep.subr.bf16.mxu0 0
  %2444 = vmatpush1.bf16.msra.mxu0 0
  %2445 = vmatprep.subr.bf16.mxu0 0
  %2446 = vmatpush1.bf16.msra.mxu0 0
  %2447 = vmatprep.subr.bf16.mxu0 0
  %2448 = vmatpush1.bf16.msra.mxu0 0
  %2449 = vmatprep.subr.bf16.mxu0 0
  %2450 = vmatpush1.bf16.msra.mxu0 0
  %2451 = vmatprep.subr.bf16.mxu0 0
  %2452 = vmatpush1.bf16.msra.mxu0 0
  %2453 = vmatprep.subr.bf16.mxu0 0
  %2454 = vmatpush1.bf16.msra.mxu0 0
  %2455 = vmatprep.subr.bf16.mxu0 0
  %2456 = vmatpush1.bf16.msra.mxu0 0
  %2457 = vmatprep.subr.bf16.mxu0 0
  %2458 = vmatpush1.bf16.msra.mxu0 0
  %2459 = vmatprep.subr.bf16.mxu0 0
  %2460 = vmatpush1.bf16.msra.mxu0 0
  %2461 = vmatprep.mubr.bf16.mxu0 0
  %2462 = vmatmul.mubr.bf16.gmra.mrb[0].mxu0 %v2427
  %v2463 = vpop.f32.mrb[0].mxu0
  %v2464 = vadd.f32 0.0, %v2463
  %v2465 = vpop.f32.mrb[0].mxu0
  %v2466 = vpop.f32.mrb[0].mxu0
  %v2467 = vpop.f32.mrb[0].mxu0
  %2468 = vdwg.mxu0
  %v2473 = vunpack.c.l.b16 %v1945
  %v2474 = vunpack.c.l.b16 %v1946
  %v2475 = vunpack.c.l.b16 %v1947
  %v2476 = vunpack.c.l.b16 %v1948
  %v2477 = vpack.c.b16 %v2474, %v2473
  %v2478 = vpack.c.b16 %v2476, %v2475
  %v2482 = vsel %vm1985, %v1902, 0
  %2484 = vmatprep.subr.bf16.mxu0 0
  %2485 = vmatpush1.bf16.msra.mxu0 %v2477
  %2486 = vmatprep.subr.bf16.mxu0 0
  %2487 = vmatpush1.bf16.msra.mxu0 %v2478
  %2488 = vmatprep.subr.bf16.mxu0 0
  %2489 = vmatpush1.bf16.msra.mxu0 0
  %2490 = vmatprep.subr.bf16.mxu0 0
  %2491 = vmatpush1.bf16.msra.mxu0 0
  %2492 = vmatprep.subr.bf16.mxu0 0
  %2493 = vmatpush1.bf16.msra.mxu0 0
  %2494 = vmatprep.subr.bf16.mxu0 0
  %2495 = vmatpush1.bf16.msra.mxu0 0
  %2496 = vmatprep.subr.bf16.mxu0 0
  %2497 = vmatpush1.bf16.msra.mxu0 0
  %2498 = vmatprep.subr.bf16.mxu0 0
  %2499 = vmatpush1.bf16.msra.mxu0 0
  %2500 = vmatprep.subr.bf16.mxu0 0
  %2501 = vmatpush1.bf16.msra.mxu0 0
  %2502 = vmatprep.subr.bf16.mxu0 0
  %2503 = vmatpush1.bf16.msra.mxu0 0
  %2504 = vmatprep.subr.bf16.mxu0 0
  %2505 = vmatpush1.bf16.msra.mxu0 0
  %2506 = vmatprep.subr.bf16.mxu0 0
  %2507 = vmatpush1.bf16.msra.mxu0 0
  %2508 = vmatprep.subr.bf16.mxu0 0
  %2509 = vmatpush1.bf16.msra.mxu0 0
  %2510 = vmatprep.subr.bf16.mxu0 0
  %2511 = vmatpush1.bf16.msra.mxu0 0
  %2512 = vmatprep.subr.bf16.mxu0 0
  %2513 = vmatpush1.bf16.msra.mxu0 0
  %2514 = vmatprep.subr.bf16.mxu0 0
  %2515 = vmatpush1.bf16.msra.mxu0 0
  %2516 = vmatprep.mubr.bf16.mxu0 0
  %2517 = vmatmul.mubr.bf16.gmra.mrb[0].mxu0 %v2482
  %v2518 = vpop.f32.mrb[0].mxu0
  %v2519 = vadd.f32 0.0, %v2518
  %v2520 = vpop.f32.mrb[0].mxu0
  %v2521 = vpop.f32.mrb[0].mxu0
  %v2522 = vpop.f32.mrb[0].mxu0
  %2523 = vdwg.mxu0
  %v2528 = vunpack.c.l.b16 %v1949
  %v2529 = vunpack.c.l.b16 %v1950
  %v2530 = vunpack.c.l.b16 %v1951
  %v2531 = vunpack.c.l.b16 %v1952
  %v2532 = vpack.c.b16 %v2529, %v2528
  %v2533 = vpack.c.b16 %v2531, %v2530
  %v2537 = vsel %vm1985, %v1903, 0
  %2539 = vmatprep.subr.bf16.mxu0 0
  %2540 = vmatpush1.bf16.msra.mxu0 %v2532
  %2541 = vmatprep.subr.bf16.mxu0 0
  %2542 = vmatpush1.bf16.msra.mxu0 %v2533
  %2543 = vmatprep.subr.bf16.mxu0 0
  %2544 = vmatpush1.bf16.msra.mxu0 0
  %2545 = vmatprep.subr.bf16.mxu0 0
  %2546 = vmatpush1.bf16.msra.mxu0 0
  %2547 = vmatprep.subr.bf16.mxu0 0
  %2548 = vmatpush1.bf16.msra.mxu0 0
  %2549 = vmatprep.subr.bf16.mxu0 0
  %2550 = vmatpush1.bf16.msra.mxu0 0
  %2551 = vmatprep.subr.bf16.mxu0 0
  %2552 = vmatpush1.bf16.msra.mxu0 0
  %2553 = vmatprep.subr.bf16.mxu0 0
  %2554 = vmatpush1.bf16.msra.mxu0 0
  %2555 = vmatprep.subr.bf16.mxu0 0
  %2556 = vmatpush1.bf16.msra.mxu0 0
  %2557 = vmatprep.subr.bf16.mxu0 0
  %2558 = vmatpush1.bf16.msra.mxu0 0
  %2559 = vmatprep.subr.bf16.mxu0 0
  %2560 = vmatpush1.bf16.msra.mxu0 0
  %2561 = vmatprep.subr.bf16.mxu0 0
  %2562 = vmatpush1.bf16.msra.mxu0 0
  %2563 = vmatprep.subr.bf16.mxu0 0
  %2564 = vmatpush1.bf16.msra.mxu0 0
  %2565 = vmatprep.subr.bf16.mxu0 0
  %2566 = vmatpush1.bf16.msra.mxu0 0
  %2567 = vmatprep.subr.bf16.mxu0 0
  %2568 = vmatpush1.bf16.msra.mxu0 0
  %2569 = vmatprep.subr.bf16.mxu0 0
  %2570 = vmatpush1.bf16.msra.mxu0 0
  %2571 = vmatprep.mubr.bf16.mxu0 0
  %2572 = vmatmul.mubr.bf16.gmra.mrb[0].mxu0 %v2537
  %v2573 = vpop.f32.mrb[0].mxu0
  %v2574 = vadd.f32 0.0, %v2573
  %v2575 = vpop.f32.mrb[0].mxu0
  %v2576 = vpop.f32.mrb[0].mxu0
  %v2577 = vpop.f32.mrb[0].mxu0
  %2578 = vdwg.mxu0
  %v2583 = vunpack.c.l.b16 %v1953
  %v2584 = vunpack.c.l.b16 %v1954
  %v2585 = vunpack.c.l.b16 %v1955
  %v2586 = vunpack.c.l.b16 %v1956
  %v2587 = vpack.c.b16 %v2584, %v2583
  %v2588 = vpack.c.b16 %v2586, %v2585
  %v2592 = vsel %vm1985, %v1904, 0
  %2594 = vmatprep.subr.bf16.mxu0 0
  %2595 = vmatpush1.bf16.msra.mxu0 %v2587
  %2596 = vmatprep.subr.bf16.mxu0 0
  %2597 = vmatpush1.bf16.msra.mxu0 %v2588
  %2598 = vmatprep.subr.bf16.mxu0 0
  %2599 = vmatpush1.bf16.msra.mxu0 0
  %2600 = vmatprep.subr.bf16.mxu0 0
  %2601 = vmatpush1.bf16.msra.mxu0 0
  %2602 = vmatprep.subr.bf16.mxu0 0
  %2603 = vmatpush1.bf16.msra.mxu0 0
  %2604 = vmatprep.subr.bf16.mxu0 0
  %2605 = vmatpush1.bf16.msra.mxu0 0
  %2606 = vmatprep.subr.bf16.mxu0 0
  %2607 = vmatpush1.bf16.msra.mxu0 0
  %2608 = vmatprep.subr.bf16.mxu0 0
  %2609 = vmatpush1.bf16.msra.mxu0 0
  %2610 = vmatprep.subr.bf16.mxu0 0
  %2611 = vmatpush1.bf16.msra.mxu0 0
  %2612 = vmatprep.subr.bf16.mxu0 0
  %2613 = vmatpush1.bf16.msra.mxu0 0
  %2614 = vmatprep.subr.bf16.mxu0 0
  %2615 = vmatpush1.bf16.msra.mxu0 0
  %2616 = vmatprep.subr.bf16.mxu0 0
  %2617 = vmatpush1.bf16.msra.mxu0 0
  %2618 = vmatprep.subr.bf16.mxu0 0
  %2619 = vmatpush1.bf16.msra.mxu0 0
  %2620 = vmatprep.subr.bf16.mxu0 0
  %2621 = vmatpush1.bf16.msra.mxu0 0
  %2622 = vmatprep.subr.bf16.mxu0 0
  %2623 = vmatpush1.bf16.msra.mxu0 0
  %2624 = vmatprep.subr.bf16.mxu0 0
  %2625 = vmatpush1.bf16.msra.mxu0 0
  %2626 = vmatprep.mubr.bf16.mxu0 0
  %2627 = vmatmul.mubr.bf16.gmra.mrb[0].mxu0 %v2592
  %v2628 = vpop.f32.mrb[0].mxu0
  %v2629 = vadd.f32 0.0, %v2628
  %v2630 = vpop.f32.mrb[0].mxu0
  %v2631 = vpop.f32.mrb[0].mxu0
  %v2632 = vpop.f32.mrb[0].mxu0
  %2633 = vdwg.mxu0
  %v2638 = vunpack.c.l.b16 %v1957
  %v2639 = vunpack.c.l.b16 %v1958
  %v2640 = vunpack.c.l.b16 %v1959
  %v2641 = vunpack.c.l.b16 %v1960
  %v2642 = vpack.c.b16 %v2639, %v2638
  %v2643 = vpack.c.b16 %v2641, %v2640
  %v2647 = vsel %vm1985, %v1905, 0
  %2649 = vmatprep.subr.bf16.mxu0 0
  %2650 = vmatpush1.bf16.msra.mxu0 %v2642
  %2651 = vmatprep.subr.bf16.mxu0 0
  %2652 = vmatpush1.bf16.msra.mxu0 %v2643
  %2653 = vmatprep.subr.bf16.mxu0 0
  %2654 = vmatpush1.bf16.msra.mxu0 0
  %2655 = vmatprep.subr.bf16.mxu0 0
  %2656 = vmatpush1.bf16.msra.mxu0 0
  %2657 = vmatprep.subr.bf16.mxu0 0
  %2658 = vmatpush1.bf16.msra.mxu0 0
  %2659 = vmatprep.subr.bf16.mxu0 0
  %2660 = vmatpush1.bf16.msra.mxu0 0
  %2661 = vmatprep.subr.bf16.mxu0 0
  %2662 = vmatpush1.bf16.msra.mxu0 0
  %2663 = vmatprep.subr.bf16.mxu0 0
  %2664 = vmatpush1.bf16.msra.mxu0 0
  %2665 = vmatprep.subr.bf16.mxu0 0
  %2666 = vmatpush1.bf16.msra.mxu0 0
  %2667 = vmatprep.subr.bf16.mxu0 0
  %2668 = vmatpush1.bf16.msra.mxu0 0
  %2669 = vmatprep.subr.bf16.mxu0 0
  %2670 = vmatpush1.bf16.msra.mxu0 0
  %2671 = vmatprep.subr.bf16.mxu0 0
  %2672 = vmatpush1.bf16.msra.mxu0 0
  %2673 = vmatprep.subr.bf16.mxu0 0
  %2674 = vmatpush1.bf16.msra.mxu0 0
  %2675 = vmatprep.subr.bf16.mxu0 0
  %2676 = vmatpush1.bf16.msra.mxu0 0
  %2677 = vmatprep.subr.bf16.mxu0 0
  %2678 = vmatpush1.bf16.msra.mxu0 0
  %2679 = vmatprep.subr.bf16.mxu0 0
  %2680 = vmatpush1.bf16.msra.mxu0 0
  %2681 = vmatprep.mubr.bf16.mxu0 0
  %2682 = vmatmul.mubr.bf16.gmra.mrb[0].mxu0 %v2647
  %v2683 = vpop.f32.mrb[0].mxu0
  %v2684 = vadd.f32 0.0, %v2683
  %v2685 = vpop.f32.mrb[0].mxu0
  %v2686 = vpop.f32.mrb[0].mxu0
  %v2687 = vpop.f32.mrb[0].mxu0
  %2688 = vdwg.mxu0
  %v2693 = vunpack.c.l.b16 %v1961
  %v2694 = vunpack.c.l.b16 %v1962
  %v2695 = vunpack.c.l.b16 %v1963
  %v2696 = vunpack.c.l.b16 %v1964
  %v2697 = vpack.c.b16 %v2694, %v2693
  %v2698 = vpack.c.b16 %v2696, %v2695
  %v2702 = vsel %vm1985, %v1906, 0
  %2704 = vmatprep.subr.bf16.mxu0 0
  %2705 = vmatpush1.bf16.msra.mxu0 %v2697
  %2706 = vmatprep.subr.bf16.mxu0 0
  %2707 = vmatpush1.bf16.msra.mxu0 %v2698
  %2708 = vmatprep.subr.bf16.mxu0 0
  %2709 = vmatpush1.bf16.msra.mxu0 0
  %2710 = vmatprep.subr.bf16.mxu0 0
  %2711 = vmatpush1.bf16.msra.mxu0 0
  %2712 = vmatprep.subr.bf16.mxu0 0
  %2713 = vmatpush1.bf16.msra.mxu0 0
  %2714 = vmatprep.subr.bf16.mxu0 0
  %2715 = vmatpush1.bf16.msra.mxu0 0
  %2716 = vmatprep.subr.bf16.mxu0 0
  %2717 = vmatpush1.bf16.msra.mxu0 0
  %2718 = vmatprep.subr.bf16.mxu0 0
  %2719 = vmatpush1.bf16.msra.mxu0 0
  %2720 = vmatprep.subr.bf16.mxu0 0
  %2721 = vmatpush1.bf16.msra.mxu0 0
  %2722 = vmatprep.subr.bf16.mxu0 0
  %2723 = vmatpush1.bf16.msra.mxu0 0
  %2724 = vmatprep.subr.bf16.mxu0 0
  %2725 = vmatpush1.bf16.msra.mxu0 0
  %2726 = vmatprep.subr.bf16.mxu0 0
  %2727 = vmatpush1.bf16.msra.mxu0 0
  %2728 = vmatprep.subr.bf16.mxu0 0
  %2729 = vmatpush1.bf16.msra.mxu0 0
  %2730 = vmatprep.subr.bf16.mxu0 0
  %2731 = vmatpush1.bf16.msra.mxu0 0
  %2732 = vmatprep.subr.bf16.mxu0 0
  %2733 = vmatpush1.bf16.msra.mxu0 0
  %2734 = vmatprep.subr.bf16.mxu0 0
  %2735 = vmatpush1.bf16.msra.mxu0 0
  %2736 = vmatprep.mubr.bf16.mxu0 0
  %2737 = vmatmul.mubr.bf16.gmra.mrb[0].mxu0 %v2702
  %v2738 = vpop.f32.mrb[0].mxu0
  %v2739 = vadd.f32 0.0, %v2738
  %v2740 = vpop.f32.mrb[0].mxu0
  %v2741 = vpop.f32.mrb[0].mxu0
  %v2742 = vpop.f32.mrb[0].mxu0
  %2743 = vdwg.mxu0
  %v2748 = vunpack.c.l.b16 %v1965
  %v2749 = vunpack.c.l.b16 %v1966
  %v2750 = vunpack.c.l.b16 %v1967
  %v2751 = vunpack.c.l.b16 %v1968
  %v2752 = vpack.c.b16 %v2749, %v2748
  %v2753 = vpack.c.b16 %v2751, %v2750
  %v2757 = vsel %vm1985, %v1907, 0
  %2759 = vmatprep.subr.bf16.mxu0 0
  %2760 = vmatpush1.bf16.msra.mxu0 %v2752
  %2761 = vmatprep.subr.bf16.mxu0 0
  %2762 = vmatpush1.bf16.msra.mxu0 %v2753
  %2763 = vmatprep.subr.bf16.mxu0 0
  %2764 = vmatpush1.bf16.msra.mxu0 0
  %2765 = vmatprep.subr.bf16.mxu0 0
  %2766 = vmatpush1.bf16.msra.mxu0 0
  %2767 = vmatprep.subr.bf16.mxu0 0
  %2768 = vmatpush1.bf16.msra.mxu0 0
  %2769 = vmatprep.subr.bf16.mxu0 0
  %2770 = vmatpush1.bf16.msra.mxu0 0
  %2771 = vmatprep.subr.bf16.mxu0 0
  %2772 = vmatpush1.bf16.msra.mxu0 0
  %2773 = vmatprep.subr.bf16.mxu0 0
  %2774 = vmatpush1.bf16.msra.mxu0 0
  %2775 = vmatprep.subr.bf16.mxu0 0
  %2776 = vmatpush1.bf16.msra.mxu0 0
  %2777 = vmatprep.subr.bf16.mxu0 0
  %2778 = vmatpush1.bf16.msra.mxu0 0
  %2779 = vmatprep.subr.bf16.mxu0 0
  %2780 = vmatpush1.bf16.msra.mxu0 0
  %2781 = vmatprep.subr.bf16.mxu0 0
  %2782 = vmatpush1.bf16.msra.mxu0 0
  %2783 = vmatprep.subr.bf16.mxu0 0
  %2784 = vmatpush1.bf16.msra.mxu0 0
  %2785 = vmatprep.subr.bf16.mxu0 0
  %2786 = vmatpush1.bf16.msra.mxu0 0
  %2787 = vmatprep.subr.bf16.mxu0 0
  %2788 = vmatpush1.bf16.msra.mxu0 0
  %2789 = vmatprep.subr.bf16.mxu0 0
  %2790 = vmatpush1.bf16.msra.mxu0 0
  %2791 = vmatprep.mubr.bf16.mxu0 0
  %2792 = vmatmul.mubr.bf16.gmra.mrb[0].mxu0 %v2757
  %v2793 = vpop.f32.mrb[0].mxu0
  %v2794 = vadd.f32 0.0, %v2793
  %v2795 = vpop.f32.mrb[0].mxu0
  %v2796 = vpop.f32.mrb[0].mxu0
  %v2797 = vpop.f32.mrb[0].mxu0
  %2798 = vdwg.mxu0
  %v2803 = vunpack.c.l.b16 %v1969
  %v2804 = vunpack.c.l.b16 %v1970
  %v2805 = vunpack.c.l.b16 %v1971
  %v2806 = vunpack.c.l.b16 %v1972
  %v2807 = vpack.c.b16 %v2804, %v2803
  %v2808 = vpack.c.b16 %v2806, %v2805
  %v2812 = vsel %vm1985, %v1908, 0
  %2814 = vmatprep.subr.bf16.mxu0 0
  %2815 = vmatpush1.bf16.msra.mxu0 %v2807
  %2816 = vmatprep.subr.bf16.mxu0 0
  %2817 = vmatpush1.bf16.msra.mxu0 %v2808
  %2818 = vmatprep.subr.bf16.mxu0 0
  %2819 = vmatpush1.bf16.msra.mxu0 0
  %2820 = vmatprep.subr.bf16.mxu0 0
  %2821 = vmatpush1.bf16.msra.mxu0 0
  %2822 = vmatprep.subr.bf16.mxu0 0
  %2823 = vmatpush1.bf16.msra.mxu0 0
  %2824 = vmatprep.subr.bf16.mxu0 0
  %2825 = vmatpush1.bf16.msra.mxu0 0
  %2826 = vmatprep.subr.bf16.mxu0 0
  %2827 = vmatpush1.bf16.msra.mxu0 0
  %2828 = vmatprep.subr.bf16.mxu0 0
  %2829 = vmatpush1.bf16.msra.mxu0 0
  %2830 = vmatprep.subr.bf16.mxu0 0
  %2831 = vmatpush1.bf16.msra.mxu0 0
  %2832 = vmatprep.subr.bf16.mxu0 0
  %2833 = vmatpush1.bf16.msra.mxu0 0
  %2834 = vmatprep.subr.bf16.mxu0 0
  %2835 = vmatpush1.bf16.msra.mxu0 0
  %2836 = vmatprep.subr.bf16.mxu0 0
  %2837 = vmatpush1.bf16.msra.mxu0 0
  %2838 = vmatprep.subr.bf16.mxu0 0
  %2839 = vmatpush1.bf16.msra.mxu0 0
  %2840 = vmatprep.subr.bf16.mxu0 0
  %2841 = vmatpush1.bf16.msra.mxu0 0
  %2842 = vmatprep.subr.bf16.mxu0 0
  %2843 = vmatpush1.bf16.msra.mxu0 0
  %2844 = vmatprep.subr.bf16.mxu0 0
  %2845 = vmatpush1.bf16.msra.mxu0 0
  %2846 = vmatprep.mubr.bf16.mxu0 0
  %2847 = vmatmul.mubr.bf16.gmra.mrb[0].mxu0 %v2812
  %v2848 = vpop.f32.mrb[0].mxu0
  %v2849 = vadd.f32 0.0, %v2848
  %v2850 = vpop.f32.mrb[0].mxu0
  %v2851 = vpop.f32.mrb[0].mxu0
  %v2852 = vpop.f32.mrb[0].mxu0
  %2853 = vdwg.mxu0
  %v2854 = vsel %vm1306, %v2024, 0.0
  %v2855 = vsel %vm1306, %v2079, 0.0
  %v2856 = vadd.f32 %v2854, %v2855
  %v2857 = vsel %vm1306, %v2134, 0.0
  %v2858 = vadd.f32 %v2856, %v2857
  %v2859 = vsel %vm1306, %v2189, 0.0
  %v2860 = vadd.f32 %v2858, %v2859
  %v2861 = vsel %vm1306, %v2244, 0.0
  %v2862 = vadd.f32 %v2860, %v2861
  %v2863 = vsel %vm1306, %v2299, 0.0
  %v2864 = vadd.f32 %v2862, %v2863
  %v2865 = vsel %vm1306, %v2354, 0.0
  %v2866 = vadd.f32 %v2864, %v2865
  %v2867 = vsel %vm1306, %v2409, 0.0
  %v2868 = vadd.f32 %v2866, %v2867
  %v2869 = vsel %vm1306, %v2464, 0.0
  %v2870 = vadd.f32 %v2868, %v2869
  %v2871 = vsel %vm1306, %v2519, 0.0
  %v2872 = vadd.f32 %v2870, %v2871
  %v2873 = vsel %vm1306, %v2574, 0.0
  %v2874 = vadd.f32 %v2872, %v2873
  %v2875 = vsel %vm1306, %v2629, 0.0
  %v2876 = vadd.f32 %v2874, %v2875
  %v2877 = vsel %vm1306, %v2684, 0.0
  %v2878 = vadd.f32 %v2876, %v2877
  %v2879 = vsel %vm1306, %v2739, 0.0
  %v2880 = vadd.f32 %v2878, %v2879
  %v2881 = vsel %vm1306, %v2794, 0.0
  %v2882 = vadd.f32 %v2880, %v2881
  %v2883 = vsel %vm1306, %v2849, 0.0
  %v2884 = vadd.f32 %v2882, %v2883
  %v2885 = vld [vmem:[%s10] sm:$0x1]
  %v2887 = vlaneseq
  %v2888 = vshrl.u32 %v2887, 7
  %v2889 = vsub.s32 0, %v2888
  %v2890 = vrot.slane %v2885, %v2889
  %v2892 = vadd.f32 %v2884, %v2890
  %v2893 = vmax.f32 %v2892, 0.0
  %v2894 = vld [vmem:[%s11] sm:$0x1]
  %v2896 = vlaneseq
  %v2897 = vshrl.u32 %v2896, 7
  %v2898 = vsub.s32 0, %v2897
  %v2899 = vrot.slane %v2894, %v2898
  %v2901 = vmul.f32 %v2893, %v2899
  %v2902 = vsel %vm1306, %v2901, 0.0
  %2903 = vadd.xlane.f32.xlu0 %v2902
  %v2904 = vpop.xlane.xlu0 %2903
  %v2905 = vld [vmem:[#allocation2] sm:$0x1]
  %v2907 = vlaneseq
  %v2908 = vshrl.u32 %v2907, 7
  %v2909 = vsub.s32 0, %v2908
  %v2910 = vrot.slane %v2905, %v2909
  %v2912 = vadd.f32 %v2904, %v2910
  %vm2913 = vcmask 7168
  %2914 = vst.msk [vmem:[%s13] sm:$0xff] %vm2913, %v2912
  // Predicated region
  $region54: #{tpu_custom_call.1} parent=0 // pred_check
    _
  $region55: #{tpu_custom_call.1} parent=0 // pred_check_branch
    %2916 = sbr.rel (0) target = $region57
  $region56: #{tpu_custom_call.1} parent=0 // pred_region
    _
  $region57: #{tpu_custom_call.1} parent=0 // pred_fallthru
    _
  // Predicated region
  $region58: #{tpu_custom_call.1} parent=0 // pred_check
    _
  $region59: #{tpu_custom_call.1} parent=0 // pred_check_branch
    %2918 = sbr.rel (0) target = $region61
  $region60: #{tpu_custom_call.1} parent=0 // pred_region
    _
  $region61: #{tpu_custom_call.1} parent=0 // pred_fallthru
    _

</llo_original>
